<compile_context>
chip_gen: v7x
topology: tpu7x:2x2x1
jax: 0.10.0
libtpu: 0.0.40
codegen_flags: <defaults>
</compile_context>

<pallas_src>
import jax
import jax.numpy as jnp
from jax.experimental import pallas as pl
from jax.experimental.pallas import tpu as pltpu

_MIB = 1024 * 1024


def _round_up(x, m):
    return ((x + m - 1) // m) * m


def _vmem_plan():
    """Return (vmem_limit_bytes, per-tile VMEM budget), generation-aware."""
    phys = 64 * _MIB  # conservative default: v7x per-TensorCore VMEM
    try:
        info = pltpu.get_tpu_info()
        phys = int(getattr(info, "vmem_capacity_bytes", phys) or phys)
    except Exception:
        pass
    if phys <= 96 * _MIB:            # v7x-class part (64 MiB per TensorCore)
        return 48 * _MIB, 24 * _MIB
    return 64 * _MIB, 40 * _MIB      # v5e / v6e (128 MiB physical VMEM)


def _pick_batch_tile(B, per_row_bytes, resident_bytes, budget, tb_cap=2048):
    """Largest sublane-aligned batch tile fitting the VMEM budget (padded
    accounting); capped so B >= 16 still gives >= 2 grid tiles (v7x 2 TCs)."""
    avail = max(0, budget - resident_bytes)
    tb = min(tb_cap, max(1, avail // max(1, per_row_bytes)))
    if B >= 16:
        tb = min(tb, _round_up(pl.cdiv(B, 2), 8))
    tb = max(8, (tb // 8) * 8)
    return min(tb, B) if B >= 8 else B


# --------------------------------------------------------------------------
# Fused path: embedding tables resident in VMEM, gather fused into the kernel.
# --------------------------------------------------------------------------
def _skipgram_fused_kernel(c_idx_ref, x_idx_ref, ctab_t_ref, xtab_ref, out_ref):
    """Fused gather + dot.  All row/column selection is an exact one-hot
    select + lane reduce on the VPU (no data-dependent addressing, no MXU
    f32 rounding); reductions over E and V accumulate in f32."""
    tb, K = x_idx_ref.shape
    E, V = ctab_t_ref.shape

    ctab_t = ctab_t_ref[...].astype(jnp.float32)   # (E, V), upcast if bf16
    xtab = xtab_ref[...].astype(jnp.float32)       # (V, E)

    # 1) center embedding rows: center_e[b, e] = center_table[center_id[b], e]
    vid = jax.lax.broadcasted_iota(jnp.int32, (tb, V), 1)
    c_hot = jnp.where(vid == c_idx_ref[...], 1.0, 0.0)                    # (tb, V)
    center_e = jnp.sum(c_hot[:, None, :] * ctab_t[None, :, :], axis=-1)   # (tb, E)

    # 2) score the center embedding against EVERY context-table row.
    scores = jnp.sum(center_e[:, None, :] * xtab[None, :, :], axis=-1)    # (tb, V)

    # 3) pick out the K requested context/negative columns per example.
    vid3 = jax.lax.broadcasted_iota(jnp.int32, (tb, K, V), 2)
    x_hot = jnp.where(vid3 == x_idx_ref[...][:, :, None], 1.0, 0.0)       # (tb, K, V)
    out_ref[...] = jnp.sum(x_hot * scores[:, None, :], axis=-1)           # (tb, K)


def _fused_forward(center_table, context_table, center_idx, ctx_idx,
                   *, vmem_limit, budget):
    V, E = center_table.shape
    B, K = ctx_idx.shape
    bpe = jnp.dtype(center_table.dtype).itemsize

    padV, padE, padK = _round_up(V, 128), _round_up(E, 128), _round_up(K, 128)
    V8, E8, K8 = _round_up(V, 8), _round_up(E, 8), _round_up(K, 8)

    # VMEM-resident tables (x2: Pallas may still allocate double buffers).
    resident = 2 * (E8 * padV + V8 * padE) * bpe
    # Per-batch-row bytes: pipelined blocks (x2 double buffer) + f32 temporaries.
    blocks = 2 * 4 * (128 + 2 * padK)              # c_idx, x_idx (i32), out (f32)
    temps = 4 * (2 * padV + padE                   # one-hots, scores, center_e
                 + E8 * padV + V8 * padE           # the two broadcast products
                 + 2 * K8 * padV)                  # ctx one-hot + its product
    tb = _pick_batch_tile(B, blocks + temps, resident, budget)

    grid = (pl.cdiv(B, tb),)
    # NOTE: K < 128 means masked partial stores on the output; output bytes are
    # negligible vs. table/index traffic, so the lane-dense (K, B)-transposed
    # layout suggested in the review is intentionally skipped.
    return pl.pallas_call(
        _skipgram_fused_kernel,
        out_shape=jax.ShapeDtypeStruct((B, K), jnp.float32),
        grid=grid,
        in_specs=[
            pl.BlockSpec((tb, 1), lambda i: (i, 0)),    # center ids
            pl.BlockSpec((tb, K), lambda i: (i, 0)),    # context/negative ids
            pl.BlockSpec((E, V), lambda i: (0, 0)),     # center table^T (resident)
            pl.BlockSpec((V, E), lambda i: (0, 0)),     # context table (resident)
        ],
        out_specs=pl.BlockSpec((tb, K), lambda i: (i, 0)),
        compiler_params=pltpu.CompilerParams(
            dimension_semantics=("parallel",),
            vmem_limit_bytes=vmem_limit,
        ),
    )(center_idx, ctx_idx, center_table.T, context_table)


# --------------------------------------------------------------------------
# Fallback path (large vocab): XLA gather + batch-tiled VPU mul / lane reduce.
# --------------------------------------------------------------------------
def _skipgram_mul_reduce_kernel(center_ref, ctx_ref, out_ref):
    """Pre-gathered activations: out[b, k] = sum_e ctx[b,k,e] * center[b,e]."""
    c = center_ref[...].astype(jnp.float32)    # (tb, E) — dense 2-D center block
    x = ctx_ref[...].astype(jnp.float32)       # (tb, K, E)
    out_ref[...] = jnp.sum(x * c[:, None, :], axis=-1)   # (tb, K), f32 accumulate


def _unfused_forward(center_table, context_table, center_idx, ctx_idx,
                     *, vmem_limit, budget):
    B, K = ctx_idx.shape
    E = center_table.shape[1]
    bpe = jnp.dtype(center_table.dtype).itemsize

    # Embedding row gather stays in XLA on this (large-vocab) path.
    center_e = jnp.take(center_table, center_idx[:, 0], axis=0)   # (B, E)
    ctx_e = jnp.take(context_table, ctx_idx, axis=0)              # (B, K, E)

    padE, padK, K8 = _round_up(E, 128), _round_up(K, 128), _round_up(K, 8)
    blocks = 2 * (padE * bpe + K8 * padE * bpe + padK * 4)   # x2 double buffer
    temps = 4 * (padE + K8 * padE)                           # in-kernel f32 upcasts
    tb = _pick_batch_tile(B, blocks + temps, 0, budget)

    grid = (pl.cdiv(B, tb),)
    return pl.pallas_call(
        _skipgram_mul_reduce_kernel,
        out_shape=jax.ShapeDtypeStruct((B, K), jnp.float32),
        grid=grid,
        in_specs=[
            pl.BlockSpec((tb, E), lambda i: (i, 0)),
            pl.BlockSpec((tb, K, E), lambda i: (i, 0, 0)),
        ],
        out_specs=pl.BlockSpec((tb, K), lambda i: (i, 0)),
        compiler_params=pltpu.CompilerParams(
            dimension_semantics=("parallel",),
            vmem_limit_bytes=vmem_limit,
        ),
    )(center_e, ctx_e)


# --------------------------------------------------------------------------
# Public wrapper (matches SkipGram.forward semantics).
# --------------------------------------------------------------------------
def skipgram_forward(center_table, context_table, center, context_negative,
                     *, max_fused_vocab=512):
    """Pallas implementation of SkipGram.forward -> (B, K) f32 scores."""
    V, E = center_table.shape
    B, K = context_negative.shape
    center_idx = center.reshape(B, 1).astype(jnp.int32)
    ctx_idx = context_negative.astype(jnp.int32)

    vmem_limit, budget = _vmem_plan()
    bpe = jnp.dtype(center_table.dtype).itemsize
    table_bytes = 2 * _round_up(V, 8) * _round_up(E, 128) * bpe

    if V <= max_fused_vocab and table_bytes <= budget // 4:
        return _fused_forward(center_table, context_table, center_idx, ctx_idx,
                              vmem_limit=vmem_limit, budget=budget)
    # TODO(synk): large-vocab fused gather (HBM tables + scalar-prefetched
    # indices + deep-buffered per-row make_async_copy) instead of this XLA
    # gather round trip.
    return _unfused_forward(center_table, context_table, center_idx, ctx_idx,
                            vmem_limit=vmem_limit, budget=budget)


if __name__ == "__main__":
    vocab_size = 32
    embed_size = 32
    B = 2            # batch
    K = 8            # 1 context + negatives per example

    key = jax.random.PRNGKey(0)
    k_ce, k_cx, k_ic, k_in = jax.random.split(key, 4)

    # nn.Embedding default init: N(0, 1)
    center_table = jax.random.normal(k_ce, (vocab_size, embed_size), jnp.float32)
    context_table = jax.random.normal(k_cx, (vocab_size, embed_size), jnp.float32)
    center = jax.random.randint(k_ic, (B, 1), 0, vocab_size, dtype=jnp.int32)
    context_negative = jax.random.randint(k_in, (B, K), 0, vocab_size, dtype=jnp.int32)

    def reference(ct, xt, c, x):
        ce = jnp.take(ct, c, axis=0).astype(jnp.float32)       # (B, 1, E)
        xe = jnp.take(xt, x, axis=0).astype(jnp.float32)       # (B, K, E)
        return jnp.sum(xe * ce, axis=-1)                       # == bmm(...).squeeze(1)

    # 1) fused (tables-in-VMEM) path, f32 tables.
    out = jax.block_until_ready(
        skipgram_forward(center_table, context_table, center, context_negative))
    ref = reference(center_table, context_table, center, context_negative)
    assert out.shape == (B, K)
    assert jnp.allclose(out, ref, atol=1e-4, rtol=1e-4)

    # 2) fused path with bf16 tables (halved table HBM/VMEM traffic; the kernel
    #    upcasts to f32 and accumulates the reductions in f32).
    ct16 = center_table.astype(jnp.bfloat16)
    xt16 = context_table.astype(jnp.bfloat16)
    out16 = jax.block_until_ready(
        skipgram_forward(ct16, xt16, center, context_negative))
    ref16 = reference(ct16, xt16, center, context_negative)
    assert jnp.allclose(out16, ref16, atol=1e-4, rtol=1e-4)

    # 3) large-vocab fallback path, forced (XLA gather + mul/reduce kernel).
    out_u = jax.block_until_ready(
        skipgram_forward(center_table, context_table, center, context_negative,
                         max_fused_vocab=0))
    assert jnp.allclose(out_u, ref, atol=1e-4, rtol=1e-4)

    print("KERNEL_OK")
</pallas_src>

<mosaic_0001>
module attributes {stable_mosaic.version = 11 : i64} {
  func.func @_skipgram_fused_kernel(%arg0: i32, %arg1: memref<2x1xi32, #tpu.memory_space<vmem>>, %arg2: memref<2x8xi32, #tpu.memory_space<vmem>>, %arg3: memref<32x32xf32, #tpu.memory_space<vmem>>, %arg4: memref<32x32xf32, #tpu.memory_space<vmem>>, %arg5: memref<2x8xf32, #tpu.memory_space<vmem>>) attributes {dimension_semantics = [#tpu.dimension_semantics<parallel>], iteration_bounds = array<i64: 1>, scalar_prefetch = 0 : i64, scratch_operands = 0 : i64, tpu.core_type = #tpu.core_type<tc>, window_params = [{transform_indices = @transform_0, window_bounds = array<i64: 2, 1>}, {transform_indices = @transform_1, window_bounds = array<i64: 2, 8>}, {pipeline_mode = #tpu.pipeline_mode<synchronous>, transform_indices = @transform_2, window_bounds = array<i64: 32, 32>}, {pipeline_mode = #tpu.pipeline_mode<synchronous>, transform_indices = @transform_3, window_bounds = array<i64: 32, 32>}, {transform_indices = @transform_4, window_bounds = array<i64: 2, 8>}]} {
    %c0 = arith.constant 0 : index
    %c0_0 = arith.constant 0 : index
    %0 = vector.load %arg3[%c0, %c0_0] : memref<32x32xf32, #tpu.memory_space<vmem>>, vector<32x32xf32>
    %c0_1 = arith.constant 0 : index
    %c0_2 = arith.constant 0 : index
    %1 = vector.load %arg4[%c0_1, %c0_2] : memref<32x32xf32, #tpu.memory_space<vmem>>, vector<32x32xf32>
    %2 = tpu.iota {dimensions = array<i32: 1>} : vector<2x32xi32>
    %c0_3 = arith.constant 0 : index
    %c0_4 = arith.constant 0 : index
    %3 = vector.load %arg1[%c0_3, %c0_4] : memref<2x1xi32, #tpu.memory_space<vmem>>, vector<2x1xi32>
    %4 = vector.broadcast %3 : vector<2x1xi32> to vector<2x32xi32>
    %5 = arith.cmpi eq, %2, %4 : vector<2x32xi32>
    %cst = arith.constant 1.000000e+00 : f32
    %cst_5 = arith.constant 0.000000e+00 : f32
    %6 = vector.broadcast %cst : f32 to vector<2x32xf32>
    %7 = vector.broadcast %cst_5 : f32 to vector<2x32xf32>
    %8 = arith.select %5, %6, %7 : vector<2x32xi1>, vector<2x32xf32>
    %9 = vector.shape_cast %8 : vector<2x32xf32> to vector<2x1x32xf32>
    %10 = vector.shape_cast %0 : vector<32x32xf32> to vector<1x32x32xf32>
    %11 = vector.broadcast %9 : vector<2x1x32xf32> to vector<2x32x32xf32>
    %12 = vector.broadcast %10 : vector<1x32x32xf32> to vector<2x32x32xf32>
    %13 = arith.mulf %11, %12 : vector<2x32x32xf32>
    %cst_6 = arith.constant dense<0.000000e+00> : vector<2x32xf32>
    %14 = vector.multi_reduction <add>, %13, %cst_6 [2] : vector<2x32x32xf32> to vector<2x32xf32>
    %15 = vector.shape_cast %14 : vector<2x32xf32> to vector<2x1x32xf32>
    %16 = vector.shape_cast %1 : vector<32x32xf32> to vector<1x32x32xf32>
    %17 = vector.broadcast %15 : vector<2x1x32xf32> to vector<2x32x32xf32>
    %18 = vector.broadcast %16 : vector<1x32x32xf32> to vector<2x32x32xf32>
    %19 = arith.mulf %17, %18 : vector<2x32x32xf32>
    %cst_7 = arith.constant dense<0.000000e+00> : vector<2x32xf32>
    %20 = vector.multi_reduction <add>, %19, %cst_7 [2] : vector<2x32x32xf32> to vector<2x32xf32>
    %21 = tpu.iota {dimensions = array<i32: 2>} : vector<2x8x32xi32>
    %c0_8 = arith.constant 0 : index
    %c0_9 = arith.constant 0 : index
    %22 = vector.load %arg2[%c0_8, %c0_9] : memref<2x8xi32, #tpu.memory_space<vmem>>, vector<2x8xi32>
    %23 = vector.shape_cast %22 : vector<2x8xi32> to vector<2x8x1xi32>
    %24 = vector.broadcast %23 : vector<2x8x1xi32> to vector<2x8x32xi32>
    %25 = arith.cmpi eq, %21, %24 : vector<2x8x32xi32>
    %cst_10 = arith.constant 1.000000e+00 : f32
    %cst_11 = arith.constant 0.000000e+00 : f32
    %26 = vector.broadcast %cst_10 : f32 to vector<2x8x32xf32>
    %27 = vector.broadcast %cst_11 : f32 to vector<2x8x32xf32>
    %28 = arith.select %25, %26, %27 : vector<2x8x32xi1>, vector<2x8x32xf32>
    %29 = vector.shape_cast %20 : vector<2x32xf32> to vector<2x1x32xf32>
    %30 = vector.broadcast %29 : vector<2x1x32xf32> to vector<2x8x32xf32>
    %31 = arith.mulf %28, %30 : vector<2x8x32xf32>
    %cst_12 = arith.constant dense<0.000000e+00> : vector<2x8xf32>
    %32 = vector.multi_reduction <add>, %31, %cst_12 [2] : vector<2x8x32xf32> to vector<2x8xf32>
    %c0_13 = arith.constant 0 : index
    %c0_14 = arith.constant 0 : index
    %33 = vector.load %arg5[%c0_13, %c0_14] : memref<2x8xf32, #tpu.memory_space<vmem>>, vector<2x8xf32>
    tpu.vector_store %arg5[%c0_13, %c0_14], %32 {strides = array<i32>} : memref<2x8xf32, #tpu.memory_space<vmem>>, vector<2x8xf32>,
    return
  }
  func.func @transform_0(%arg0: i32) -> (i32, i32) {
    %c0_i32 = arith.constant 0 : i32
    %c0_i32_0 = arith.constant 0 : i32
    return %arg0, %c0_i32 : i32, i32
  }
  func.func @transform_1(%arg0: i32) -> (i32, i32) {
    %c0_i32 = arith.constant 0 : i32
    %c0_i32_0 = arith.constant 0 : i32
    return %arg0, %c0_i32 : i32, i32
  }
  func.func @transform_2(%arg0: i32) -> (i32, i32) {
    %c0_i32 = arith.constant 0 : i32
    %c0_i32_0 = arith.constant 0 : i32
    %c0_i32_1 = arith.constant 0 : i32
    return %c0_i32, %c0_i32_0 : i32, i32
  }
  func.func @transform_3(%arg0: i32) -> (i32, i32) {
    %c0_i32 = arith.constant 0 : i32
    %c0_i32_0 = arith.constant 0 : i32
    %c0_i32_1 = arith.constant 0 : i32
    return %c0_i32, %c0_i32_0 : i32, i32
  }
  func.func @transform_4(%arg0: i32) -> (i32, i32) {
    %c0_i32 = arith.constant 0 : i32
    %c0_i32_0 = arith.constant 0 : i32
    return %arg0, %c0_i32 : i32, i32
  }
}

</mosaic_0001>

<llo_original>
// kernel: tpu_custom_call.1
$region0: #{tpu_custom_call.1}
  #allocation0 [shape = 'u32[]', space=smem, size = 0x4, offset = 0x4, fixed_abs, tag = 'smem constant byte address 0x4 - core index']
  #allocation1 [shape = 'u32[144,128]{1,0:T(1,128)}', space=vmem, size = 0x12000, scoped, tag = 'internal scratch']
  %s0 = inlined_call_operand.vmem [shape: s32[2,1], index: 0, kind: input, shape index: {}]
  %s1 = inlined_call_operand.vmem [shape: s32[2,8], index: 1, kind: input, shape index: {}]
  %s2 = inlined_call_operand.hbm [shape: f32[32,32], index: 2, kind: input, shape index: {}]
  %s3 = inlined_call_operand.hbm [shape: f32[32,32], index: 3, kind: input, shape index: {}]
  %s4 = inlined_call_operand.hbm [shape: f32[2,8], index: 4, kind: output, shape index: {}]
  %s5 = sld [smem:[#allocation0]]
  $region34: #{tpu_custom_call.1} parent=0
    _
  %s7 = ssub.s32 1, %s5
  %s8 = scalar_select 0, %s7, %s5
  $region1: #{tpu_custom_call.1} parent=0
    #allocation2 [shape = 'u8[16384]{0}', space=vmem, size = 0x4000, scoped, tag = 'input window, operand 2, single buffered']
    #allocation3 [shape = 's32[1]{0}', space=sflag, size = 0x4, scoped, tag = 'scoped memory for tpu_custom_call.1']
    #allocation4 [shape = 's32[1]{0}', space=sflag, size = 0x4, scoped, tag = 'scoped memory for tpu_custom_call.1']
    #allocation5 [shape = 'u8[16384]{0}', space=vmem, size = 0x4000, scoped, tag = 'input window, operand 3, single buffered']
    #allocation6 [shape = 's32[1]{0}', space=sflag, size = 0x4, scoped, tag = 'scoped memory for tpu_custom_call.1']
    #allocation7 [shape = 'u8[1024]{0}', space=vmem, size = 0x400, scoped, tag = 'output window, operand 0, single buffered']
    %9 = vsyncpa [#allocation3], 0
    %10 = vsyncpa [#allocation6], 0
    %11 = vsyncpa [#allocation4], 0
    // Predicated region
    $region2: #{tpu_custom_call.1} parent=1 // pred_check
      _
    $region3: #{tpu_custom_call.1} parent=1 // pred_check_branch
      %13 = sbr.rel (0) target = $region5
    $region4: #{tpu_custom_call.1} parent=1 // pred_region
      _
    $region5: #{tpu_custom_call.1} parent=1 // pred_fallthru
      _
    // Predicated region
    $region6: #{tpu_custom_call.1} parent=1 // pred_check
      _
    $region7: #{tpu_custom_call.1} parent=1 // pred_check_branch
      %15 = sbr.rel (0) target = $region9
    $region8: #{tpu_custom_call.1} parent=1 // pred_region
      _
    $region9: #{tpu_custom_call.1} parent=1 // pred_fallthru
      _
    // Predicated region
    $region10: #{tpu_custom_call.1} parent=1 // pred_check
      _
    $region11: #{tpu_custom_call.1} parent=1 // pred_check_branch
      %17 = sbr.rel (0) target = $region13
    $region12: #{tpu_custom_call.1} parent=1 // pred_region
      %s19 = ssub.s32 512, 512
      %20 = vsyncadd [#allocation3], %s19
      %s21 = sshll.u32 [#allocation2], 4
      %s22 = int_to_ptr.vmem [resolvable:$true] %s21
      %27 = dma.hbm_to_vmem [thread:$0]  %s2, 512, %s22, [#allocation3], 128, 128, 8
    $region13: #{tpu_custom_call.1} parent=1 // pred_fallthru
      _
    // Predicated region
    $region14: #{tpu_custom_call.1} parent=1 // pred_check
      _
    $region15: #{tpu_custom_call.1} parent=1 // pred_check_branch
      %29 = sbr.rel (0) target = $region17
    $region16: #{tpu_custom_call.1} parent=1 // pred_region
      %s31 = ssub.s32 512, 512
      %32 = vsyncadd [#allocation6], %s31
      %s33 = sshll.u32 [#allocation5], 4
      %s34 = int_to_ptr.vmem [resolvable:$true] %s33
      %39 = dma.hbm_to_vmem [thread:$0]  %s3, 512, %s34, [#allocation6], 128, 128, 8
    $region17: #{tpu_custom_call.1} parent=1 // pred_fallthru
      _
    // Predicated region
    $region18: #{tpu_custom_call.1} parent=1 // pred_check
      _
    $region19: #{tpu_custom_call.1} parent=1 // pred_check_branch
      %41 = sbr.rel (0) target = $region21
    $region20: #{tpu_custom_call.1} parent=1 // pred_region
      %42 = dma.done [#allocation3], 512
    $region21: #{tpu_custom_call.1} parent=1 // pred_fallthru
      _
    // Predicated region
    $region22: #{tpu_custom_call.1} parent=1 // pred_check
      _
    $region23: #{tpu_custom_call.1} parent=1 // pred_check_branch
      %44 = sbr.rel (0) target = $region25
    $region24: #{tpu_custom_call.1} parent=1 // pred_region
      %45 = dma.done [#allocation6], 512
    $region25: #{tpu_custom_call.1} parent=1 // pred_fallthru
      _
    %v46 = vld [vmem:[#allocation2] sm:$0xff]
    %v47 = vld [vmem:[#allocation2 + $0x8] sm:$0xff]
    %v48 = vld [vmem:[#allocation2 + $0x10] sm:$0xff]
    %v49 = vld [vmem:[#allocation2 + $0x18] sm:$0xff]
    %v50 = vld [vmem:[#allocation5] sm:$0xff]
    %v51 = vld [vmem:[#allocation5 + $0x8] sm:$0xff]
    %v52 = vld [vmem:[#allocation5 + $0x10] sm:$0xff]
    %v53 = vld [vmem:[#allocation5 + $0x18] sm:$0xff]
    %v54 = vlaneseq
    %v55 = vand.u32 %v54, 127
    %v56 = vld [vmem:[%s0] sm:$0x3]
    %57 = vset.pattern.permute.xlu0 0
    %58 = vperm.xlu0 %57, %v56
    %v59 = vpop.permute.xlu0 %58
    %vm60 = vcmp.eq.s32.totalorder %v55, %v59
    %v61 = vsel %vm60, 1.0, 0.0
    %v64 = vunpack.c.l.s4 1966171168
    %v65 = vunpack.c.0.s8 %v64
    %v66 = vlaneseq
    %v67 = vshrl.u32 %v66, 7
    %v68 = vsub.s32 %v65, %v67
    %v69 = vrot.slane %v61, %v68
    %v70 = vcombine.high %v69, %v69
    %v72 = vunpack.c.l.s4 1966171168
    %v73 = vunpack.c.0.s8 %v72
    %v74 = vlaneseq
    %v75 = vshrl.u32 %v74, 7
    %v76 = vsub.s32 %v73, %v75
    %v77 = vrot.slane %v69, %v76
    %v79 = vunpack.c.l.s4 1966171168
    %v80 = vunpack.c.0.s8 %v79
    %v81 = vlaneseq
    %v82 = vshrl.u32 %v81, 7
    %v83 = vsub.s32 %v80, %v82
    %v84 = vrot.slane %v70, %v83
    %v85 = vlaneseq
    %v86 = vshrl.u32 %v85, 7
    %v87 = vsub.s32 0, %v86
    %v88 = vrot.slane %v77, %v87
    %v89 = vlaneseq
    %v90 = vshrl.u32 %v89, 7
    %v91 = vsub.s32 0, %v90
    %v92 = vrot.slane %v84, %v91
    %v95 = vmul.f32 %v88, %v46
    %v96 = vmul.f32 %v88, %v47
    %v97 = vmul.f32 %v88, %v48
    %v98 = vmul.f32 %v88, %v49
    %v99 = vmul.f32 %v92, %v46
    %v100 = vmul.f32 %v92, %v47
    %v101 = vmul.f32 %v92, %v48
    %v102 = vmul.f32 %v92, %v49
    %vm103 = vcmask 261120
    %v104 = vsel %vm103, %v95, 0.0
    %105 = vadd.xlane.f32.xlu0 %v104
    %v106 = vpop.xlane.xlu0 %105
    %v107 = vsel %vm103, %v96, 0.0
    %108 = vadd.xlane.f32.xlu0 %v107
    %v109 = vpop.xlane.xlu0 %108
    %v110 = vsel %vm103, %v97, 0.0
    %111 = vadd.xlane.f32.xlu0 %v110
    %v112 = vpop.xlane.xlu0 %111
    %v113 = vsel %vm103, %v98, 0.0
    %114 = vadd.xlane.f32.xlu0 %v113
    %v115 = vpop.xlane.xlu0 %114
    %v116 = vsel %vm103, %v99, 0.0
    %117 = vadd.xlane.f32.xlu0 %v116
    %v118 = vpop.xlane.xlu0 %117
    %v119 = vsel %vm103, %v100, 0.0
    %120 = vadd.xlane.f32.xlu0 %v119
    %v121 = vpop.xlane.xlu0 %120
    %v122 = vsel %vm103, %v101, 0.0
    %123 = vadd.xlane.f32.xlu0 %v122
    %v124 = vpop.xlane.xlu0 %123
    %v125 = vsel %vm103, %v102, 0.0
    %126 = vadd.xlane.f32.xlu0 %v125
    %v127 = vpop.xlane.xlu0 %126
    %v132 = vlaneseq
    %v133 = vshrl.u32 %v132, 7
    %v134 = vsub.s32 0, %v133
    %v135 = vrot.slane %v50, %v134
    %137 = vbcast.lane.b32.xlu0 %v135, 256
    %v138 = vpop.permute.xlu0 %137
    %s140 = sor.u32 256, 8
    %141 = vbcast.lane.b32.xlu0 %v135, %s140
    %v142 = vpop.permute.xlu0 %141
    %s144 = sor.u32 256, 16
    %145 = vbcast.lane.b32.xlu0 %v135, %s144
    %v146 = vpop.permute.xlu0 %145
    %s148 = sor.u32 256, 24
    %149 = vbcast.lane.b32.xlu0 %v135, %s148
    %v150 = vpop.permute.xlu0 %149
    %v151 = vlaneseq
    %v152 = vshrl.u32 %v151, 7
    %v153 = vsub.s32 1, %v152
    %v154 = vrot.slane %v50, %v153
    %156 = vbcast.lane.b32.xlu0 %v154, 256
    %v157 = vpop.permute.xlu0 %156
    %s159 = sor.u32 256, 8
    %160 = vbcast.lane.b32.xlu0 %v154, %s159
    %v161 = vpop.permute.xlu0 %160
    %s163 = sor.u32 256, 16
    %164 = vbcast.lane.b32.xlu0 %v154, %s163
    %v165 = vpop.permute.xlu0 %164
    %s167 = sor.u32 256, 24
    %168 = vbcast.lane.b32.xlu0 %v154, %s167
    %v169 = vpop.permute.xlu0 %168
    %v170 = vlaneseq
    %v171 = vshrl.u32 %v170, 7
    %v172 = vsub.s32 2, %v171
    %v173 = vrot.slane %v50, %v172
    %175 = vbcast.lane.b32.xlu0 %v173, 256
    %v176 = vpop.permute.xlu0 %175
    %s178 = sor.u32 256, 8
    %179 = vbcast.lane.b32.xlu0 %v173, %s178
    %v180 = vpop.permute.xlu0 %179
    %s182 = sor.u32 256, 16
    %183 = vbcast.lane.b32.xlu0 %v173, %s182
    %v184 = vpop.permute.xlu0 %183
    %s186 = sor.u32 256, 24
    %187 = vbcast.lane.b32.xlu0 %v173, %s186
    %v188 = vpop.permute.xlu0 %187
    %v189 = vlaneseq
    %v190 = vshrl.u32 %v189, 7
    %v191 = vsub.s32 3, %v190
    %v192 = vrot.slane %v50, %v191
    %194 = vbcast.lane.b32.xlu0 %v192, 256
    %v195 = vpop.permute.xlu0 %194
    %s197 = sor.u32 256, 8
    %198 = vbcast.lane.b32.xlu0 %v192, %s197
    %v199 = vpop.permute.xlu0 %198
    %s201 = sor.u32 256, 16
    %202 = vbcast.lane.b32.xlu0 %v192, %s201
    %v203 = vpop.permute.xlu0 %202
    %s205 = sor.u32 256, 24
    %206 = vbcast.lane.b32.xlu0 %v192, %s205
    %v207 = vpop.permute.xlu0 %206
    %v208 = vlaneseq
    %v209 = vshrl.u32 %v208, 7
    %v210 = vsub.s32 4, %v209
    %v211 = vrot.slane %v50, %v210
    %213 = vbcast.lane.b32.xlu0 %v211, 256
    %v214 = vpop.permute.xlu0 %213
    %s216 = sor.u32 256, 8
    %217 = vbcast.lane.b32.xlu0 %v211, %s216
    %v218 = vpop.permute.xlu0 %217
    %s220 = sor.u32 256, 16
    %221 = vbcast.lane.b32.xlu0 %v211, %s220
    %v222 = vpop.permute.xlu0 %221
    %s224 = sor.u32 256, 24
    %225 = vbcast.lane.b32.xlu0 %v211, %s224
    %v226 = vpop.permute.xlu0 %225
    %v227 = vlaneseq
    %v228 = vshrl.u32 %v227, 7
    %v229 = vsub.s32 5, %v228
    %v230 = vrot.slane %v50, %v229
    %232 = vbcast.lane.b32.xlu0 %v230, 256
    %v233 = vpop.permute.xlu0 %232
    %s235 = sor.u32 256, 8
    %236 = vbcast.lane.b32.xlu0 %v230, %s235
    %v237 = vpop.permute.xlu0 %236
    %s239 = sor.u32 256, 16
    %240 = vbcast.lane.b32.xlu0 %v230, %s239
    %v241 = vpop.permute.xlu0 %240
    %s243 = sor.u32 256, 24
    %244 = vbcast.lane.b32.xlu0 %v230, %s243
    %v245 = vpop.permute.xlu0 %244
    %v246 = vlaneseq
    %v247 = vshrl.u32 %v246, 7
    %v248 = vsub.s32 6, %v247
    %v249 = vrot.slane %v50, %v248
    %251 = vbcast.lane.b32.xlu0 %v249, 256
    %v252 = vpop.permute.xlu0 %251
    %s254 = sor.u32 256, 8
    %255 = vbcast.lane.b32.xlu0 %v249, %s254
    %v256 = vpop.permute.xlu0 %255
    %s258 = sor.u32 256, 16
    %259 = vbcast.lane.b32.xlu0 %v249, %s258
    %v260 = vpop.permute.xlu0 %259
    %s262 = sor.u32 256, 24
    %263 = vbcast.lane.b32.xlu0 %v249, %s262
    %v264 = vpop.permute.xlu0 %263
    %v265 = vlaneseq
    %v266 = vshrl.u32 %v265, 7
    %v267 = vsub.s32 7, %v266
    %v268 = vrot.slane %v50, %v267
    %270 = vbcast.lane.b32.xlu0 %v268, 256
    %v271 = vpop.permute.xlu0 %270
    %s273 = sor.u32 256, 8
    %274 = vbcast.lane.b32.xlu0 %v268, %s273
    %v275 = vpop.permute.xlu0 %274
    %s277 = sor.u32 256, 16
    %278 = vbcast.lane.b32.xlu0 %v268, %s277
    %v279 = vpop.permute.xlu0 %278
    %s281 = sor.u32 256, 24
    %282 = vbcast.lane.b32.xlu0 %v268, %s281
    %v283 = vpop.permute.xlu0 %282
    %v284 = vlaneseq
    %v285 = vshrl.u32 %v284, 7
    %v286 = vsub.s32 0, %v285
    %v287 = vrot.slane %v51, %v286
    %289 = vbcast.lane.b32.xlu0 %v287, 256
    %v290 = vpop.permute.xlu0 %289
    %s292 = sor.u32 256, 8
    %293 = vbcast.lane.b32.xlu0 %v287, %s292
    %v294 = vpop.permute.xlu0 %293
    %s296 = sor.u32 256, 16
    %297 = vbcast.lane.b32.xlu0 %v287, %s296
    %v298 = vpop.permute.xlu0 %297
    %s300 = sor.u32 256, 24
    %301 = vbcast.lane.b32.xlu0 %v287, %s300
    %v302 = vpop.permute.xlu0 %301
    %v303 = vlaneseq
    %v304 = vshrl.u32 %v303, 7
    %v305 = vsub.s32 1, %v304
    %v306 = vrot.slane %v51, %v305
    %308 = vbcast.lane.b32.xlu0 %v306, 256
    %v309 = vpop.permute.xlu0 %308
    %s311 = sor.u32 256, 8
    %312 = vbcast.lane.b32.xlu0 %v306, %s311
    %v313 = vpop.permute.xlu0 %312
    %s315 = sor.u32 256, 16
    %316 = vbcast.lane.b32.xlu0 %v306, %s315
    %v317 = vpop.permute.xlu0 %316
    %s319 = sor.u32 256, 24
    %320 = vbcast.lane.b32.xlu0 %v306, %s319
    %v321 = vpop.permute.xlu0 %320
    %v322 = vlaneseq
    %v323 = vshrl.u32 %v322, 7
    %v324 = vsub.s32 2, %v323
    %v325 = vrot.slane %v51, %v324
    %327 = vbcast.lane.b32.xlu0 %v325, 256
    %v328 = vpop.permute.xlu0 %327
    %s330 = sor.u32 256, 8
    %331 = vbcast.lane.b32.xlu0 %v325, %s330
    %v332 = vpop.permute.xlu0 %331
    %s334 = sor.u32 256, 16
    %335 = vbcast.lane.b32.xlu0 %v325, %s334
    %v336 = vpop.permute.xlu0 %335
    %s338 = sor.u32 256, 24
    %339 = vbcast.lane.b32.xlu0 %v325, %s338
    %v340 = vpop.permute.xlu0 %339
    %v341 = vlaneseq
    %v342 = vshrl.u32 %v341, 7
    %v343 = vsub.s32 3, %v342
    %v344 = vrot.slane %v51, %v343
    %346 = vbcast.lane.b32.xlu0 %v344, 256
    %v347 = vpop.permute.xlu0 %346
    %s349 = sor.u32 256, 8
    %350 = vbcast.lane.b32.xlu0 %v344, %s349
    %v351 = vpop.permute.xlu0 %350
    %s353 = sor.u32 256, 16
    %354 = vbcast.lane.b32.xlu0 %v344, %s353
    %v355 = vpop.permute.xlu0 %354
    %s357 = sor.u32 256, 24
    %358 = vbcast.lane.b32.xlu0 %v344, %s357
    %v359 = vpop.permute.xlu0 %358
    %v360 = vlaneseq
    %v361 = vshrl.u32 %v360, 7
    %v362 = vsub.s32 4, %v361
    %v363 = vrot.slane %v51, %v362
    %365 = vbcast.lane.b32.xlu0 %v363, 256
    %v366 = vpop.permute.xlu0 %365
    %s368 = sor.u32 256, 8
    %369 = vbcast.lane.b32.xlu0 %v363, %s368
    %v370 = vpop.permute.xlu0 %369
    %s372 = sor.u32 256, 16
    %373 = vbcast.lane.b32.xlu0 %v363, %s372
    %v374 = vpop.permute.xlu0 %373
    %s376 = sor.u32 256, 24
    %377 = vbcast.lane.b32.xlu0 %v363, %s376
    %v378 = vpop.permute.xlu0 %377
    %v379 = vlaneseq
    %v380 = vshrl.u32 %v379, 7
    %v381 = vsub.s32 5, %v380
    %v382 = vrot.slane %v51, %v381
    %384 = vbcast.lane.b32.xlu0 %v382, 256
    %v385 = vpop.permute.xlu0 %384
    %s387 = sor.u32 256, 8
    %388 = vbcast.lane.b32.xlu0 %v382, %s387
    %v389 = vpop.permute.xlu0 %388
    %s391 = sor.u32 256, 16
    %392 = vbcast.lane.b32.xlu0 %v382, %s391
    %v393 = vpop.permute.xlu0 %392
    %s395 = sor.u32 256, 24
    %396 = vbcast.lane.b32.xlu0 %v382, %s395
    %v397 = vpop.permute.xlu0 %396
    %v398 = vlaneseq
    %v399 = vshrl.u32 %v398, 7
    %v400 = vsub.s32 6, %v399
    %v401 = vrot.slane %v51, %v400
    %403 = vbcast.lane.b32.xlu0 %v401, 256
    %v404 = vpop.permute.xlu0 %403
    %s406 = sor.u32 256, 8
    %407 = vbcast.lane.b32.xlu0 %v401, %s406
    %v408 = vpop.permute.xlu0 %407
    %s410 = sor.u32 256, 16
    %411 = vbcast.lane.b32.xlu0 %v401, %s410
    %v412 = vpop.permute.xlu0 %411
    %s414 = sor.u32 256, 24
    %415 = vbcast.lane.b32.xlu0 %v401, %s414
    %v416 = vpop.permute.xlu0 %415
    %v417 = vlaneseq
    %v418 = vshrl.u32 %v417, 7
    %v419 = vsub.s32 7, %v418
    %v420 = vrot.slane %v51, %v419
    %422 = vbcast.lane.b32.xlu0 %v420, 256
    %v423 = vpop.permute.xlu0 %422
    %s425 = sor.u32 256, 8
    %426 = vbcast.lane.b32.xlu0 %v420, %s425
    %v427 = vpop.permute.xlu0 %426
    %s429 = sor.u32 256, 16
    %430 = vbcast.lane.b32.xlu0 %v420, %s429
    %v431 = vpop.permute.xlu0 %430
    %s433 = sor.u32 256, 24
    %434 = vbcast.lane.b32.xlu0 %v420, %s433
    %v435 = vpop.permute.xlu0 %434
    %v436 = vlaneseq
    %v437 = vshrl.u32 %v436, 7
    %v438 = vsub.s32 0, %v437
    %v439 = vrot.slane %v52, %v438
    %441 = vbcast.lane.b32.xlu0 %v439, 256
    %v442 = vpop.permute.xlu0 %441
    %s444 = sor.u32 256, 8
    %445 = vbcast.lane.b32.xlu0 %v439, %s444
    %v446 = vpop.permute.xlu0 %445
    %s448 = sor.u32 256, 16
    %449 = vbcast.lane.b32.xlu0 %v439, %s448
    %v450 = vpop.permute.xlu0 %449
    %s452 = sor.u32 256, 24
    %453 = vbcast.lane.b32.xlu0 %v439, %s452
    %v454 = vpop.permute.xlu0 %453
    %v455 = vlaneseq
    %v456 = vshrl.u32 %v455, 7
    %v457 = vsub.s32 1, %v456
    %v458 = vrot.slane %v52, %v457
    %460 = vbcast.lane.b32.xlu0 %v458, 256
    %v461 = vpop.permute.xlu0 %460
    %s463 = sor.u32 256, 8
    %464 = vbcast.lane.b32.xlu0 %v458, %s463
    %v465 = vpop.permute.xlu0 %464
    %s467 = sor.u32 256, 16
    %468 = vbcast.lane.b32.xlu0 %v458, %s467
    %v469 = vpop.permute.xlu0 %468
    %s471 = sor.u32 256, 24
    %472 = vbcast.lane.b32.xlu0 %v458, %s471
    %v473 = vpop.permute.xlu0 %472
    %v474 = vlaneseq
    %v475 = vshrl.u32 %v474, 7
    %v476 = vsub.s32 2, %v475
    %v477 = vrot.slane %v52, %v476
    %479 = vbcast.lane.b32.xlu0 %v477, 256
    %v480 = vpop.permute.xlu0 %479
    %s482 = sor.u32 256, 8
    %483 = vbcast.lane.b32.xlu0 %v477, %s482
    %v484 = vpop.permute.xlu0 %483
    %s486 = sor.u32 256, 16
    %487 = vbcast.lane.b32.xlu0 %v477, %s486
    %v488 = vpop.permute.xlu0 %487
    %s490 = sor.u32 256, 24
    %491 = vbcast.lane.b32.xlu0 %v477, %s490
    %v492 = vpop.permute.xlu0 %491
    %v493 = vlaneseq
    %v494 = vshrl.u32 %v493, 7
    %v495 = vsub.s32 3, %v494
    %v496 = vrot.slane %v52, %v495
    %498 = vbcast.lane.b32.xlu0 %v496, 256
    %v499 = vpop.permute.xlu0 %498
    %s501 = sor.u32 256, 8
    %502 = vbcast.lane.b32.xlu0 %v496, %s501
    %v503 = vpop.permute.xlu0 %502
    %s505 = sor.u32 256, 16
    %506 = vbcast.lane.b32.xlu0 %v496, %s505
    %v507 = vpop.permute.xlu0 %506
    %s509 = sor.u32 256, 24
    %510 = vbcast.lane.b32.xlu0 %v496, %s509
    %v511 = vpop.permute.xlu0 %510
    %v512 = vlaneseq
    %v513 = vshrl.u32 %v512, 7
    %v514 = vsub.s32 4, %v513
    %v515 = vrot.slane %v52, %v514
    %517 = vbcast.lane.b32.xlu0 %v515, 256
    %v518 = vpop.permute.xlu0 %517
    %s520 = sor.u32 256, 8
    %521 = vbcast.lane.b32.xlu0 %v515, %s520
    %v522 = vpop.permute.xlu0 %521
    %s524 = sor.u32 256, 16
    %525 = vbcast.lane.b32.xlu0 %v515, %s524
    %v526 = vpop.permute.xlu0 %525
    %s528 = sor.u32 256, 24
    %529 = vbcast.lane.b32.xlu0 %v515, %s528
    %v530 = vpop.permute.xlu0 %529
    %v531 = vlaneseq
    %v532 = vshrl.u32 %v531, 7
    %v533 = vsub.s32 5, %v532
    %v534 = vrot.slane %v52, %v533
    %536 = vbcast.lane.b32.xlu0 %v534, 256
    %v537 = vpop.permute.xlu0 %536
    %s539 = sor.u32 256, 8
    %540 = vbcast.lane.b32.xlu0 %v534, %s539
    %v541 = vpop.permute.xlu0 %540
    %s543 = sor.u32 256, 16
    %544 = vbcast.lane.b32.xlu0 %v534, %s543
    %v545 = vpop.permute.xlu0 %544
    %s547 = sor.u32 256, 24
    %548 = vbcast.lane.b32.xlu0 %v534, %s547
    %v549 = vpop.permute.xlu0 %548
    %v550 = vlaneseq
    %v551 = vshrl.u32 %v550, 7
    %v552 = vsub.s32 6, %v551
    %v553 = vrot.slane %v52, %v552
    %555 = vbcast.lane.b32.xlu0 %v553, 256
    %v556 = vpop.permute.xlu0 %555
    %s558 = sor.u32 256, 8
    %559 = vbcast.lane.b32.xlu0 %v553, %s558
    %v560 = vpop.permute.xlu0 %559
    %s562 = sor.u32 256, 16
    %563 = vbcast.lane.b32.xlu0 %v553, %s562
    %v564 = vpop.permute.xlu0 %563
    %s566 = sor.u32 256, 24
    %567 = vbcast.lane.b32.xlu0 %v553, %s566
    %v568 = vpop.permute.xlu0 %567
    %v569 = vlaneseq
    %v570 = vshrl.u32 %v569, 7
    %v571 = vsub.s32 7, %v570
    %v572 = vrot.slane %v52, %v571
    %574 = vbcast.lane.b32.xlu0 %v572, 256
    %v575 = vpop.permute.xlu0 %574
    %s577 = sor.u32 256, 8
    %578 = vbcast.lane.b32.xlu0 %v572, %s577
    %v579 = vpop.permute.xlu0 %578
    %s581 = sor.u32 256, 16
    %582 = vbcast.lane.b32.xlu0 %v572, %s581
    %v583 = vpop.permute.xlu0 %582
    %s585 = sor.u32 256, 24
    %586 = vbcast.lane.b32.xlu0 %v572, %s585
    %v587 = vpop.permute.xlu0 %586
    %v588 = vlaneseq
    %v589 = vshrl.u32 %v588, 7
    %v590 = vsub.s32 0, %v589
    %v591 = vrot.slane %v53, %v590
    %593 = vbcast.lane.b32.xlu0 %v591, 256
    %v594 = vpop.permute.xlu0 %593
    %s596 = sor.u32 256, 8
    %597 = vbcast.lane.b32.xlu0 %v591, %s596
    %v598 = vpop.permute.xlu0 %597
    %s600 = sor.u32 256, 16
    %601 = vbcast.lane.b32.xlu0 %v591, %s600
    %v602 = vpop.permute.xlu0 %601
    %s604 = sor.u32 256, 24
    %605 = vbcast.lane.b32.xlu0 %v591, %s604
    %v606 = vpop.permute.xlu0 %605
    %v607 = vlaneseq
    %v608 = vshrl.u32 %v607, 7
    %v609 = vsub.s32 1, %v608
    %v610 = vrot.slane %v53, %v609
    %612 = vbcast.lane.b32.xlu0 %v610, 256
    %v613 = vpop.permute.xlu0 %612
    %s615 = sor.u32 256, 8
    %616 = vbcast.lane.b32.xlu0 %v610, %s615
    %v617 = vpop.permute.xlu0 %616
    %s619 = sor.u32 256, 16
    %620 = vbcast.lane.b32.xlu0 %v610, %s619
    %v621 = vpop.permute.xlu0 %620
    %s623 = sor.u32 256, 24
    %624 = vbcast.lane.b32.xlu0 %v610, %s623
    %v625 = vpop.permute.xlu0 %624
    %v626 = vlaneseq
    %v627 = vshrl.u32 %v626, 7
    %v628 = vsub.s32 2, %v627
    %v629 = vrot.slane %v53, %v628
    %631 = vbcast.lane.b32.xlu0 %v629, 256
    %v632 = vpop.permute.xlu0 %631
    %s634 = sor.u32 256, 8
    %635 = vbcast.lane.b32.xlu0 %v629, %s634
    %v636 = vpop.permute.xlu0 %635
    %s638 = sor.u32 256, 16
    %639 = vbcast.lane.b32.xlu0 %v629, %s638
    %v640 = vpop.permute.xlu0 %639
    %s642 = sor.u32 256, 24
    %643 = vbcast.lane.b32.xlu0 %v629, %s642
    %v644 = vpop.permute.xlu0 %643
    %v645 = vlaneseq
    %v646 = vshrl.u32 %v645, 7
    %v647 = vsub.s32 3, %v646
    %v648 = vrot.slane %v53, %v647
    %650 = vbcast.lane.b32.xlu0 %v648, 256
    %v651 = vpop.permute.xlu0 %650
    %s653 = sor.u32 256, 8
    %654 = vbcast.lane.b32.xlu0 %v648, %s653
    %v655 = vpop.permute.xlu0 %654
    %s657 = sor.u32 256, 16
    %658 = vbcast.lane.b32.xlu0 %v648, %s657
    %v659 = vpop.permute.xlu0 %658
    %s661 = sor.u32 256, 24
    %662 = vbcast.lane.b32.xlu0 %v648, %s661
    %v663 = vpop.permute.xlu0 %662
    %v664 = vlaneseq
    %v665 = vshrl.u32 %v664, 7
    %v666 = vsub.s32 4, %v665
    %v667 = vrot.slane %v53, %v666
    %669 = vbcast.lane.b32.xlu0 %v667, 256
    %v670 = vpop.permute.xlu0 %669
    %s672 = sor.u32 256, 8
    %673 = vbcast.lane.b32.xlu0 %v667, %s672
    %v674 = vpop.permute.xlu0 %673
    %s676 = sor.u32 256, 16
    %677 = vbcast.lane.b32.xlu0 %v667, %s676
    %v678 = vpop.permute.xlu0 %677
    %s680 = sor.u32 256, 24
    %681 = vbcast.lane.b32.xlu0 %v667, %s680
    %v682 = vpop.permute.xlu0 %681
    %v683 = vlaneseq
    %v684 = vshrl.u32 %v683, 7
    %v685 = vsub.s32 5, %v684
    %v686 = vrot.slane %v53, %v685
    %688 = vbcast.lane.b32.xlu0 %v686, 256
    %v689 = vpop.permute.xlu0 %688
    %s691 = sor.u32 256, 8
    %692 = vbcast.lane.b32.xlu0 %v686, %s691
    %v693 = vpop.permute.xlu0 %692
    %s695 = sor.u32 256, 16
    %696 = vbcast.lane.b32.xlu0 %v686, %s695
    %v697 = vpop.permute.xlu0 %696
    %s699 = sor.u32 256, 24
    %700 = vbcast.lane.b32.xlu0 %v686, %s699
    %v701 = vpop.permute.xlu0 %700
    %v702 = vlaneseq
    %v703 = vshrl.u32 %v702, 7
    %v704 = vsub.s32 6, %v703
    %v705 = vrot.slane %v53, %v704
    %707 = vbcast.lane.b32.xlu0 %v705, 256
    %v708 = vpop.permute.xlu0 %707
    %s710 = sor.u32 256, 8
    %711 = vbcast.lane.b32.xlu0 %v705, %s710
    %v712 = vpop.permute.xlu0 %711
    %s714 = sor.u32 256, 16
    %715 = vbcast.lane.b32.xlu0 %v705, %s714
    %v716 = vpop.permute.xlu0 %715
    %s718 = sor.u32 256, 24
    %719 = vbcast.lane.b32.xlu0 %v705, %s718
    %v720 = vpop.permute.xlu0 %719
    %v721 = vlaneseq
    %v722 = vshrl.u32 %v721, 7
    %v723 = vsub.s32 7, %v722
    %v724 = vrot.slane %v53, %v723
    %726 = vbcast.lane.b32.xlu0 %v724, 256
    %v727 = vpop.permute.xlu0 %726
    %s729 = sor.u32 256, 8
    %730 = vbcast.lane.b32.xlu0 %v724, %s729
    %v731 = vpop.permute.xlu0 %730
    %s733 = sor.u32 256, 16
    %734 = vbcast.lane.b32.xlu0 %v724, %s733
    %v735 = vpop.permute.xlu0 %734
    %s737 = sor.u32 256, 24
    %738 = vbcast.lane.b32.xlu0 %v724, %s737
    %v739 = vpop.permute.xlu0 %738
    %v868 = vmul.f32 %v106, %v138
    %v869 = vmul.f32 %v109, %v142
    %v870 = vmul.f32 %v112, %v146
    %v871 = vmul.f32 %v115, %v150
    %v872 = vmul.f32 %v106, %v157
    %v873 = vmul.f32 %v109, %v161
    %v874 = vmul.f32 %v112, %v165
    %v875 = vmul.f32 %v115, %v169
    %v876 = vmul.f32 %v106, %v176
    %v877 = vmul.f32 %v109, %v180
    %v878 = vmul.f32 %v112, %v184
    %v879 = vmul.f32 %v115, %v188
    %v880 = vmul.f32 %v106, %v195
    %v881 = vmul.f32 %v109, %v199
    %v882 = vmul.f32 %v112, %v203
    %v883 = vmul.f32 %v115, %v207
    %v884 = vmul.f32 %v106, %v214
    %v885 = vmul.f32 %v109, %v218
    %v886 = vmul.f32 %v112, %v222
    %v887 = vmul.f32 %v115, %v226
    %v888 = vmul.f32 %v106, %v233
    %v889 = vmul.f32 %v109, %v237
    %v890 = vmul.f32 %v112, %v241
    %v891 = vmul.f32 %v115, %v245
    %v892 = vmul.f32 %v106, %v252
    %v893 = vmul.f32 %v109, %v256
    %v894 = vmul.f32 %v112, %v260
    %v895 = vmul.f32 %v115, %v264
    %v896 = vmul.f32 %v106, %v271
    %v897 = vmul.f32 %v109, %v275
    %v898 = vmul.f32 %v112, %v279
    %v899 = vmul.f32 %v115, %v283
    %v900 = vmul.f32 %v106, %v290
    %v901 = vmul.f32 %v109, %v294
    %v902 = vmul.f32 %v112, %v298
    %v903 = vmul.f32 %v115, %v302
    %v904 = vmul.f32 %v106, %v309
    %v905 = vmul.f32 %v109, %v313
    %v906 = vmul.f32 %v112, %v317
    %v907 = vmul.f32 %v115, %v321
    %v908 = vmul.f32 %v106, %v328
    %v909 = vmul.f32 %v109, %v332
    %v910 = vmul.f32 %v112, %v336
    %v911 = vmul.f32 %v115, %v340
    %v912 = vmul.f32 %v106, %v347
    %v913 = vmul.f32 %v109, %v351
    %v914 = vmul.f32 %v112, %v355
    %v915 = vmul.f32 %v115, %v359
    %v916 = vmul.f32 %v106, %v366
    %v917 = vmul.f32 %v109, %v370
    %v918 = vmul.f32 %v112, %v374
    %v919 = vmul.f32 %v115, %v378
    %v920 = vmul.f32 %v106, %v385
    %v921 = vmul.f32 %v109, %v389
    %v922 = vmul.f32 %v112, %v393
    %v923 = vmul.f32 %v115, %v397
    %v924 = vmul.f32 %v106, %v404
    %v925 = vmul.f32 %v109, %v408
    %v926 = vmul.f32 %v112, %v412
    %v927 = vmul.f32 %v115, %v416
    %v928 = vmul.f32 %v106, %v423
    %v929 = vmul.f32 %v109, %v427
    %v930 = vmul.f32 %v112, %v431
    %v931 = vmul.f32 %v115, %v435
    %v932 = vmul.f32 %v106, %v442
    %v933 = vmul.f32 %v109, %v446
    %v934 = vmul.f32 %v112, %v450
    %v935 = vmul.f32 %v115, %v454
    %v936 = vmul.f32 %v106, %v461
    %v937 = vmul.f32 %v109, %v465
    %v938 = vmul.f32 %v112, %v469
    %v939 = vmul.f32 %v115, %v473
    %v940 = vmul.f32 %v106, %v480
    %v941 = vmul.f32 %v109, %v484
    %v942 = vmul.f32 %v112, %v488
    %v943 = vmul.f32 %v115, %v492
    %v944 = vmul.f32 %v106, %v499
    %v945 = vmul.f32 %v109, %v503
    %v946 = vmul.f32 %v112, %v507
    %v947 = vmul.f32 %v115, %v511
    %v948 = vmul.f32 %v106, %v518
    %v949 = vmul.f32 %v109, %v522
    %v950 = vmul.f32 %v112, %v526
    %v951 = vmul.f32 %v115, %v530
    %v952 = vmul.f32 %v106, %v537
    %v953 = vmul.f32 %v109, %v541
    %v954 = vmul.f32 %v112, %v545
    %v955 = vmul.f32 %v115, %v549
    %v956 = vmul.f32 %v106, %v556
    %v957 = vmul.f32 %v109, %v560
    %v958 = vmul.f32 %v112, %v564
    %v959 = vmul.f32 %v115, %v568
    %v960 = vmul.f32 %v106, %v575
    %v961 = vmul.f32 %v109, %v579
    %v962 = vmul.f32 %v112, %v583
    %v963 = vmul.f32 %v115, %v587
    %v964 = vmul.f32 %v106, %v594
    %v965 = vmul.f32 %v109, %v598
    %v966 = vmul.f32 %v112, %v602
    %v967 = vmul.f32 %v115, %v606
    %v968 = vmul.f32 %v106, %v613
    %v969 = vmul.f32 %v109, %v617
    %v970 = vmul.f32 %v112, %v621
    %v971 = vmul.f32 %v115, %v625
    %v972 = vmul.f32 %v106, %v632
    %v973 = vmul.f32 %v109, %v636
    %v974 = vmul.f32 %v112, %v640
    %v975 = vmul.f32 %v115, %v644
    %v976 = vmul.f32 %v106, %v651
    %v977 = vmul.f32 %v109, %v655
    %v978 = vmul.f32 %v112, %v659
    %v979 = vmul.f32 %v115, %v663
    %v980 = vmul.f32 %v106, %v670
    %v981 = vmul.f32 %v109, %v674
    %v982 = vmul.f32 %v112, %v678
    %v983 = vmul.f32 %v115, %v682
    %v984 = vmul.f32 %v106, %v689
    %v985 = vmul.f32 %v109, %v693
    %v986 = vmul.f32 %v112, %v697
    %v987 = vmul.f32 %v115, %v701
    %v988 = vmul.f32 %v106, %v708
    %v989 = vmul.f32 %v109, %v712
    %v990 = vmul.f32 %v112, %v716
    %v991 = vmul.f32 %v115, %v720
    %v992 = vmul.f32 %v106, %v727
    %v993 = vmul.f32 %v109, %v731
    %v994 = vmul.f32 %v112, %v735
    %v995 = vmul.f32 %v115, %v739
    %v996 = vmul.f32 %v118, %v138
    %v997 = vmul.f32 %v121, %v142
    %v998 = vmul.f32 %v124, %v146
    %v999 = vmul.f32 %v127, %v150
    %v1000 = vmul.f32 %v118, %v157
    %v1001 = vmul.f32 %v121, %v161
    %v1002 = vmul.f32 %v124, %v165
    %v1003 = vmul.f32 %v127, %v169
    %v1004 = vmul.f32 %v118, %v176
    %v1005 = vmul.f32 %v121, %v180
    %v1006 = vmul.f32 %v124, %v184
    %v1007 = vmul.f32 %v127, %v188
    %v1008 = vmul.f32 %v118, %v195
    %v1009 = vmul.f32 %v121, %v199
    %v1010 = vmul.f32 %v124, %v203
    %v1011 = vmul.f32 %v127, %v207
    %v1012 = vmul.f32 %v118, %v214
    %v1013 = vmul.f32 %v121, %v218
    %v1014 = vmul.f32 %v124, %v222
    %v1015 = vmul.f32 %v127, %v226
    %v1016 = vmul.f32 %v118, %v233
    %v1017 = vmul.f32 %v121, %v237
    %v1018 = vmul.f32 %v124, %v241
    %v1019 = vmul.f32 %v127, %v245
    %v1020 = vmul.f32 %v118, %v252
    %v1021 = vmul.f32 %v121, %v256
    %v1022 = vmul.f32 %v124, %v260
    %v1023 = vmul.f32 %v127, %v264
    %v1024 = vmul.f32 %v118, %v271
    %v1025 = vmul.f32 %v121, %v275
    %v1026 = vmul.f32 %v124, %v279
    %v1027 = vmul.f32 %v127, %v283
    %v1028 = vmul.f32 %v118, %v290
    %v1029 = vmul.f32 %v121, %v294
    %v1030 = vmul.f32 %v124, %v298
    %v1031 = vmul.f32 %v127, %v302
    %v1032 = vmul.f32 %v118, %v309
    %v1033 = vmul.f32 %v121, %v313
    %v1034 = vmul.f32 %v124, %v317
    %v1035 = vmul.f32 %v127, %v321
    %v1036 = vmul.f32 %v118, %v328
    %v1037 = vmul.f32 %v121, %v332
    %v1038 = vmul.f32 %v124, %v336
    %v1039 = vmul.f32 %v127, %v340
    %v1040 = vmul.f32 %v118, %v347
    %v1041 = vmul.f32 %v121, %v351
    %v1042 = vmul.f32 %v124, %v355
    %v1043 = vmul.f32 %v127, %v359
    %v1044 = vmul.f32 %v118, %v366
    %v1045 = vmul.f32 %v121, %v370
    %v1046 = vmul.f32 %v124, %v374
    %v1047 = vmul.f32 %v127, %v378
    %v1048 = vmul.f32 %v118, %v385
    %v1049 = vmul.f32 %v121, %v389
    %v1050 = vmul.f32 %v124, %v393
    %v1051 = vmul.f32 %v127, %v397
    %v1052 = vmul.f32 %v118, %v404
    %v1053 = vmul.f32 %v121, %v408
    %v1054 = vmul.f32 %v124, %v412
    %v1055 = vmul.f32 %v127, %v416
    %v1056 = vmul.f32 %v118, %v423
    %v1057 = vmul.f32 %v121, %v427
    %v1058 = vmul.f32 %v124, %v431
    %v1059 = vmul.f32 %v127, %v435
    %v1060 = vmul.f32 %v118, %v442
    %v1061 = vmul.f32 %v121, %v446
    %v1062 = vmul.f32 %v124, %v450
    %v1063 = vmul.f32 %v127, %v454
    %v1064 = vmul.f32 %v118, %v461
    %v1065 = vmul.f32 %v121, %v465
    %v1066 = vmul.f32 %v124, %v469
    %v1067 = vmul.f32 %v127, %v473
    %v1068 = vmul.f32 %v118, %v480
    %v1069 = vmul.f32 %v121, %v484
    %v1070 = vmul.f32 %v124, %v488
    %v1071 = vmul.f32 %v127, %v492
    %v1072 = vmul.f32 %v118, %v499
    %v1073 = vmul.f32 %v121, %v503
    %v1074 = vmul.f32 %v124, %v507
    %v1075 = vmul.f32 %v127, %v511
    %v1076 = vmul.f32 %v118, %v518
    %v1077 = vmul.f32 %v121, %v522
    %v1078 = vmul.f32 %v124, %v526
    %v1079 = vmul.f32 %v127, %v530
    %v1080 = vmul.f32 %v118, %v537
    %v1081 = vmul.f32 %v121, %v541
    %v1082 = vmul.f32 %v124, %v545
    %v1083 = vmul.f32 %v127, %v549
    %v1084 = vmul.f32 %v118, %v556
    %v1085 = vmul.f32 %v121, %v560
    %v1086 = vmul.f32 %v124, %v564
    %v1087 = vmul.f32 %v127, %v568
    %v1088 = vmul.f32 %v118, %v575
    %v1089 = vmul.f32 %v121, %v579
    %v1090 = vmul.f32 %v124, %v583
    %v1091 = vmul.f32 %v127, %v587
    %v1092 = vmul.f32 %v118, %v594
    %v1093 = vmul.f32 %v121, %v598
    %v1094 = vmul.f32 %v124, %v602
    %v1095 = vmul.f32 %v127, %v606
    %v1096 = vmul.f32 %v118, %v613
    %v1097 = vmul.f32 %v121, %v617
    %v1098 = vmul.f32 %v124, %v621
    %v1099 = vmul.f32 %v127, %v625
    %v1100 = vmul.f32 %v118, %v632
    %v1101 = vmul.f32 %v121, %v636
    %v1102 = vmul.f32 %v124, %v640
    %v1103 = vmul.f32 %v127, %v644
    %v1104 = vmul.f32 %v118, %v651
    %v1105 = vmul.f32 %v121, %v655
    %v1106 = vmul.f32 %v124, %v659
    %v1107 = vmul.f32 %v127, %v663
    %v1108 = vmul.f32 %v118, %v670
    %v1109 = vmul.f32 %v121, %v674
    %v1110 = vmul.f32 %v124, %v678
    %v1111 = vmul.f32 %v127, %v682
    %v1112 = vmul.f32 %v118, %v689
    %v1113 = vmul.f32 %v121, %v693
    %v1114 = vmul.f32 %v124, %v697
    %v1115 = vmul.f32 %v127, %v701
    %v1116 = vmul.f32 %v118, %v708
    %v1117 = vmul.f32 %v121, %v712
    %v1118 = vmul.f32 %v124, %v716
    %v1119 = vmul.f32 %v127, %v720
    %v1120 = vmul.f32 %v118, %v727
    %v1121 = vmul.f32 %v121, %v731
    %v1122 = vmul.f32 %v124, %v735
    %v1123 = vmul.f32 %v127, %v739
    %1380 = vset.pattern.permute.xlu0 0
    %1381 = vperm.xlu0 %1380, %v868
    %v1382 = vpop.permute.xlu0 %1381
    %1383 = vset.pattern.permute.xlu0 0
    %1384 = vperm.xlu0 %1383, %v869
    %v1385 = vpop.permute.xlu0 %1384
    %1386 = vset.pattern.permute.xlu0 0
    %1387 = vperm.xlu0 %1386, %v870
    %v1388 = vpop.permute.xlu0 %1387
    %1389 = vset.pattern.permute.xlu0 0
    %1390 = vperm.xlu0 %1389, %v871
    %v1391 = vpop.permute.xlu0 %1390
    %1392 = vset.pattern.permute.xlu0 0
    %1393 = vperm.xlu0 %1392, %v872
    %v1394 = vpop.permute.xlu0 %1393
    %1395 = vset.pattern.permute.xlu0 0
    %1396 = vperm.xlu0 %1395, %v873
    %v1397 = vpop.permute.xlu0 %1396
    %1398 = vset.pattern.permute.xlu0 0
    %1399 = vperm.xlu0 %1398, %v874
    %v1400 = vpop.permute.xlu0 %1399
    %1401 = vset.pattern.permute.xlu0 0
    %1402 = vperm.xlu0 %1401, %v875
    %v1403 = vpop.permute.xlu0 %1402
    %1404 = vset.pattern.permute.xlu0 0
    %1405 = vperm.xlu0 %1404, %v876
    %v1406 = vpop.permute.xlu0 %1405
    %1407 = vset.pattern.permute.xlu0 0
    %1408 = vperm.xlu0 %1407, %v877
    %v1409 = vpop.permute.xlu0 %1408
    %1410 = vset.pattern.permute.xlu0 0
    %1411 = vperm.xlu0 %1410, %v878
    %v1412 = vpop.permute.xlu0 %1411
    %1413 = vset.pattern.permute.xlu0 0
    %1414 = vperm.xlu0 %1413, %v879
    %v1415 = vpop.permute.xlu0 %1414
    %1416 = vset.pattern.permute.xlu0 0
    %1417 = vperm.xlu0 %1416, %v880
    %v1418 = vpop.permute.xlu0 %1417
    %1419 = vset.pattern.permute.xlu0 0
    %1420 = vperm.xlu0 %1419, %v881
    %v1421 = vpop.permute.xlu0 %1420
    %1422 = vset.pattern.permute.xlu0 0
    %1423 = vperm.xlu0 %1422, %v882
    %v1424 = vpop.permute.xlu0 %1423
    %1425 = vset.pattern.permute.xlu0 0
    %1426 = vperm.xlu0 %1425, %v883
    %v1427 = vpop.permute.xlu0 %1426
    %1428 = vset.pattern.permute.xlu0 0
    %1429 = vperm.xlu0 %1428, %v884
    %v1430 = vpop.permute.xlu0 %1429
    %1431 = vset.pattern.permute.xlu0 0
    %1432 = vperm.xlu0 %1431, %v885
    %v1433 = vpop.permute.xlu0 %1432
    %1434 = vset.pattern.permute.xlu0 0
    %1435 = vperm.xlu0 %1434, %v886
    %v1436 = vpop.permute.xlu0 %1435
    %1437 = vset.pattern.permute.xlu0 0
    %1438 = vperm.xlu0 %1437, %v887
    %v1439 = vpop.permute.xlu0 %1438
    %1440 = vset.pattern.permute.xlu0 0
    %1441 = vperm.xlu0 %1440, %v888
    %v1442 = vpop.permute.xlu0 %1441
    %1443 = vset.pattern.permute.xlu0 0
    %1444 = vperm.xlu0 %1443, %v889
    %v1445 = vpop.permute.xlu0 %1444
    %1446 = vset.pattern.permute.xlu0 0
    %1447 = vperm.xlu0 %1446, %v890
    %v1448 = vpop.permute.xlu0 %1447
    %1449 = vset.pattern.permute.xlu0 0
    %1450 = vperm.xlu0 %1449, %v891
    %v1451 = vpop.permute.xlu0 %1450
    %1452 = vset.pattern.permute.xlu0 0
    %1453 = vperm.xlu0 %1452, %v892
    %v1454 = vpop.permute.xlu0 %1453
    %1455 = vset.pattern.permute.xlu0 0
    %1456 = vperm.xlu0 %1455, %v893
    %v1457 = vpop.permute.xlu0 %1456
    %1458 = vset.pattern.permute.xlu0 0
    %1459 = vperm.xlu0 %1458, %v894
    %v1460 = vpop.permute.xlu0 %1459
    %1461 = vset.pattern.permute.xlu0 0
    %1462 = vperm.xlu0 %1461, %v895
    %v1463 = vpop.permute.xlu0 %1462
    %1464 = vset.pattern.permute.xlu0 0
    %1465 = vperm.xlu0 %1464, %v896
    %v1466 = vpop.permute.xlu0 %1465
    %1467 = vset.pattern.permute.xlu0 0
    %1468 = vperm.xlu0 %1467, %v897
    %v1469 = vpop.permute.xlu0 %1468
    %1470 = vset.pattern.permute.xlu0 0
    %1471 = vperm.xlu0 %1470, %v898
    %v1472 = vpop.permute.xlu0 %1471
    %1473 = vset.pattern.permute.xlu0 0
    %1474 = vperm.xlu0 %1473, %v899
    %v1475 = vpop.permute.xlu0 %1474
    %1476 = vset.pattern.permute.xlu0 0
    %1477 = vperm.xlu0 %1476, %v900
    %v1478 = vpop.permute.xlu0 %1477
    %1479 = vset.pattern.permute.xlu0 0
    %1480 = vperm.xlu0 %1479, %v901
    %v1481 = vpop.permute.xlu0 %1480
    %1482 = vset.pattern.permute.xlu0 0
    %1483 = vperm.xlu0 %1482, %v902
    %v1484 = vpop.permute.xlu0 %1483
    %1485 = vset.pattern.permute.xlu0 0
    %1486 = vperm.xlu0 %1485, %v903
    %v1487 = vpop.permute.xlu0 %1486
    %1488 = vset.pattern.permute.xlu0 0
    %1489 = vperm.xlu0 %1488, %v904
    %v1490 = vpop.permute.xlu0 %1489
    %1491 = vset.pattern.permute.xlu0 0
    %1492 = vperm.xlu0 %1491, %v905
    %v1493 = vpop.permute.xlu0 %1492
    %1494 = vset.pattern.permute.xlu0 0
    %1495 = vperm.xlu0 %1494, %v906
    %v1496 = vpop.permute.xlu0 %1495
    %1497 = vset.pattern.permute.xlu0 0
    %1498 = vperm.xlu0 %1497, %v907
    %v1499 = vpop.permute.xlu0 %1498
    %1500 = vset.pattern.permute.xlu0 0
    %1501 = vperm.xlu0 %1500, %v908
    %v1502 = vpop.permute.xlu0 %1501
    %1503 = vset.pattern.permute.xlu0 0
    %1504 = vperm.xlu0 %1503, %v909
    %v1505 = vpop.permute.xlu0 %1504
    %1506 = vset.pattern.permute.xlu0 0
    %1507 = vperm.xlu0 %1506, %v910
    %v1508 = vpop.permute.xlu0 %1507
    %1509 = vset.pattern.permute.xlu0 0
    %1510 = vperm.xlu0 %1509, %v911
    %v1511 = vpop.permute.xlu0 %1510
    %1512 = vset.pattern.permute.xlu0 0
    %1513 = vperm.xlu0 %1512, %v912
    %v1514 = vpop.permute.xlu0 %1513
    %1515 = vset.pattern.permute.xlu0 0
    %1516 = vperm.xlu0 %1515, %v913
    %v1517 = vpop.permute.xlu0 %1516
    %1518 = vset.pattern.permute.xlu0 0
    %1519 = vperm.xlu0 %1518, %v914
    %v1520 = vpop.permute.xlu0 %1519
    %1521 = vset.pattern.permute.xlu0 0
    %1522 = vperm.xlu0 %1521, %v915
    %v1523 = vpop.permute.xlu0 %1522
    %1524 = vset.pattern.permute.xlu0 0
    %1525 = vperm.xlu0 %1524, %v916
    %v1526 = vpop.permute.xlu0 %1525
    %1527 = vset.pattern.permute.xlu0 0
    %1528 = vperm.xlu0 %1527, %v917
    %v1529 = vpop.permute.xlu0 %1528
    %1530 = vset.pattern.permute.xlu0 0
    %1531 = vperm.xlu0 %1530, %v918
    %v1532 = vpop.permute.xlu0 %1531
    %1533 = vset.pattern.permute.xlu0 0
    %1534 = vperm.xlu0 %1533, %v919
    %v1535 = vpop.permute.xlu0 %1534
    %1536 = vset.pattern.permute.xlu0 0
    %1537 = vperm.xlu0 %1536, %v920
    %v1538 = vpop.permute.xlu0 %1537
    %1539 = vset.pattern.permute.xlu0 0
    %1540 = vperm.xlu0 %1539, %v921
    %v1541 = vpop.permute.xlu0 %1540
    %1542 = vset.pattern.permute.xlu0 0
    %1543 = vperm.xlu0 %1542, %v922
    %v1544 = vpop.permute.xlu0 %1543
    %1545 = vset.pattern.permute.xlu0 0
    %1546 = vperm.xlu0 %1545, %v923
    %v1547 = vpop.permute.xlu0 %1546
    %1548 = vset.pattern.permute.xlu0 0
    %1549 = vperm.xlu0 %1548, %v924
    %v1550 = vpop.permute.xlu0 %1549
    %1551 = vset.pattern.permute.xlu0 0
    %1552 = vperm.xlu0 %1551, %v925
    %v1553 = vpop.permute.xlu0 %1552
    %1554 = vset.pattern.permute.xlu0 0
    %1555 = vperm.xlu0 %1554, %v926
    %v1556 = vpop.permute.xlu0 %1555
    %1557 = vset.pattern.permute.xlu0 0
    %1558 = vperm.xlu0 %1557, %v927
    %v1559 = vpop.permute.xlu0 %1558
    %1560 = vset.pattern.permute.xlu0 0
    %1561 = vperm.xlu0 %1560, %v928
    %v1562 = vpop.permute.xlu0 %1561
    %1563 = vset.pattern.permute.xlu0 0
    %1564 = vperm.xlu0 %1563, %v929
    %v1565 = vpop.permute.xlu0 %1564
    %1566 = vset.pattern.permute.xlu0 0
    %1567 = vperm.xlu0 %1566, %v930
    %v1568 = vpop.permute.xlu0 %1567
    %1569 = vset.pattern.permute.xlu0 0
    %1570 = vperm.xlu0 %1569, %v931
    %v1571 = vpop.permute.xlu0 %1570
    %1572 = vset.pattern.permute.xlu0 0
    %1573 = vperm.xlu0 %1572, %v932
    %v1574 = vpop.permute.xlu0 %1573
    %1575 = vset.pattern.permute.xlu0 0
    %1576 = vperm.xlu0 %1575, %v933
    %v1577 = vpop.permute.xlu0 %1576
    %1578 = vset.pattern.permute.xlu0 0
    %1579 = vperm.xlu0 %1578, %v934
    %v1580 = vpop.permute.xlu0 %1579
    %1581 = vset.pattern.permute.xlu0 0
    %1582 = vperm.xlu0 %1581, %v935
    %v1583 = vpop.permute.xlu0 %1582
    %1584 = vset.pattern.permute.xlu0 0
    %1585 = vperm.xlu0 %1584, %v936
    %v1586 = vpop.permute.xlu0 %1585
    %1587 = vset.pattern.permute.xlu0 0
    %1588 = vperm.xlu0 %1587, %v937
    %v1589 = vpop.permute.xlu0 %1588
    %1590 = vset.pattern.permute.xlu0 0
    %1591 = vperm.xlu0 %1590, %v938
    %v1592 = vpop.permute.xlu0 %1591
    %1593 = vset.pattern.permute.xlu0 0
    %1594 = vperm.xlu0 %1593, %v939
    %v1595 = vpop.permute.xlu0 %1594
    %1596 = vset.pattern.permute.xlu0 0
    %1597 = vperm.xlu0 %1596, %v940
    %v1598 = vpop.permute.xlu0 %1597
    %1599 = vset.pattern.permute.xlu0 0
    %1600 = vperm.xlu0 %1599, %v941
    %v1601 = vpop.permute.xlu0 %1600
    %1602 = vset.pattern.permute.xlu0 0
    %1603 = vperm.xlu0 %1602, %v942
    %v1604 = vpop.permute.xlu0 %1603
    %1605 = vset.pattern.permute.xlu0 0
    %1606 = vperm.xlu0 %1605, %v943
    %v1607 = vpop.permute.xlu0 %1606
    %1608 = vset.pattern.permute.xlu0 0
    %1609 = vperm.xlu0 %1608, %v944
    %v1610 = vpop.permute.xlu0 %1609
    %1611 = vset.pattern.permute.xlu0 0
    %1612 = vperm.xlu0 %1611, %v945
    %v1613 = vpop.permute.xlu0 %1612
    %1614 = vset.pattern.permute.xlu0 0
    %1615 = vperm.xlu0 %1614, %v946
    %v1616 = vpop.permute.xlu0 %1615
    %1617 = vset.pattern.permute.xlu0 0
    %1618 = vperm.xlu0 %1617, %v947
    %v1619 = vpop.permute.xlu0 %1618
    %1620 = vset.pattern.permute.xlu0 0
    %1621 = vperm.xlu0 %1620, %v948
    %v1622 = vpop.permute.xlu0 %1621
    %1623 = vset.pattern.permute.xlu0 0
    %1624 = vperm.xlu0 %1623, %v949
    %v1625 = vpop.permute.xlu0 %1624
    %1626 = vset.pattern.permute.xlu0 0
    %1627 = vperm.xlu0 %1626, %v950
    %v1628 = vpop.permute.xlu0 %1627
    %1629 = vset.pattern.permute.xlu0 0
    %1630 = vperm.xlu0 %1629, %v951
    %v1631 = vpop.permute.xlu0 %1630
    %1632 = vset.pattern.permute.xlu0 0
    %1633 = vperm.xlu0 %1632, %v952
    %v1634 = vpop.permute.xlu0 %1633
    %1635 = vset.pattern.permute.xlu0 0
    %1636 = vperm.xlu0 %1635, %v953
    %v1637 = vpop.permute.xlu0 %1636
    %1638 = vset.pattern.permute.xlu0 0
    %1639 = vperm.xlu0 %1638, %v954
    %v1640 = vpop.permute.xlu0 %1639
    %1641 = vset.pattern.permute.xlu0 0
    %1642 = vperm.xlu0 %1641, %v955
    %v1643 = vpop.permute.xlu0 %1642
    %1644 = vset.pattern.permute.xlu0 0
    %1645 = vperm.xlu0 %1644, %v956
    %v1646 = vpop.permute.xlu0 %1645
    %1647 = vset.pattern.permute.xlu0 0
    %1648 = vperm.xlu0 %1647, %v957
    %v1649 = vpop.permute.xlu0 %1648
    %1650 = vset.pattern.permute.xlu0 0
    %1651 = vperm.xlu0 %1650, %v958
    %v1652 = vpop.permute.xlu0 %1651
    %1653 = vset.pattern.permute.xlu0 0
    %1654 = vperm.xlu0 %1653, %v959
    %v1655 = vpop.permute.xlu0 %1654
    %1656 = vset.pattern.permute.xlu0 0
    %1657 = vperm.xlu0 %1656, %v960
    %v1658 = vpop.permute.xlu0 %1657
    %1659 = vset.pattern.permute.xlu0 0
    %1660 = vperm.xlu0 %1659, %v961
    %v1661 = vpop.permute.xlu0 %1660
    %1662 = vset.pattern.permute.xlu0 0
    %1663 = vperm.xlu0 %1662, %v962
    %v1664 = vpop.permute.xlu0 %1663
    %1665 = vset.pattern.permute.xlu0 0
    %1666 = vperm.xlu0 %1665, %v963
    %v1667 = vpop.permute.xlu0 %1666
    %1668 = vset.pattern.permute.xlu0 0
    %1669 = vperm.xlu0 %1668, %v964
    %v1670 = vpop.permute.xlu0 %1669
    %1671 = vset.pattern.permute.xlu0 0
    %1672 = vperm.xlu0 %1671, %v965
    %v1673 = vpop.permute.xlu0 %1672
    %1674 = vset.pattern.permute.xlu0 0
    %1675 = vperm.xlu0 %1674, %v966
    %v1676 = vpop.permute.xlu0 %1675
    %1677 = vset.pattern.permute.xlu0 0
    %1678 = vperm.xlu0 %1677, %v967
    %v1679 = vpop.permute.xlu0 %1678
    %1680 = vset.pattern.permute.xlu0 0
    %1681 = vperm.xlu0 %1680, %v968
    %v1682 = vpop.permute.xlu0 %1681
    %1683 = vset.pattern.permute.xlu0 0
    %1684 = vperm.xlu0 %1683, %v969
    %v1685 = vpop.permute.xlu0 %1684
    %1686 = vset.pattern.permute.xlu0 0
    %1687 = vperm.xlu0 %1686, %v970
    %v1688 = vpop.permute.xlu0 %1687
    %1689 = vset.pattern.permute.xlu0 0
    %1690 = vperm.xlu0 %1689, %v971
    %v1691 = vpop.permute.xlu0 %1690
    %1692 = vset.pattern.permute.xlu0 0
    %1693 = vperm.xlu0 %1692, %v972
    %v1694 = vpop.permute.xlu0 %1693
    %1695 = vset.pattern.permute.xlu0 0
    %1696 = vperm.xlu0 %1695, %v973
    %v1697 = vpop.permute.xlu0 %1696
    %1698 = vset.pattern.permute.xlu0 0
    %1699 = vperm.xlu0 %1698, %v974
    %v1700 = vpop.permute.xlu0 %1699
    %1701 = vset.pattern.permute.xlu0 0
    %1702 = vperm.xlu0 %1701, %v975
    %v1703 = vpop.permute.xlu0 %1702
    %1704 = vset.pattern.permute.xlu0 0
    %1705 = vperm.xlu0 %1704, %v976
    %v1706 = vpop.permute.xlu0 %1705
    %1707 = vset.pattern.permute.xlu0 0
    %1708 = vperm.xlu0 %1707, %v977
    %v1709 = vpop.permute.xlu0 %1708
    %1710 = vset.pattern.permute.xlu0 0
    %1711 = vperm.xlu0 %1710, %v978
    %v1712 = vpop.permute.xlu0 %1711
    %1713 = vset.pattern.permute.xlu0 0
    %1714 = vperm.xlu0 %1713, %v979
    %v1715 = vpop.permute.xlu0 %1714
    %1716 = vset.pattern.permute.xlu0 0
    %1717 = vperm.xlu0 %1716, %v980
    %v1718 = vpop.permute.xlu0 %1717
    %1719 = vset.pattern.permute.xlu0 0
    %1720 = vperm.xlu0 %1719, %v981
    %v1721 = vpop.permute.xlu0 %1720
    %1722 = vset.pattern.permute.xlu0 0
    %1723 = vperm.xlu0 %1722, %v982
    %v1724 = vpop.permute.xlu0 %1723
    %1725 = vset.pattern.permute.xlu0 0
    %1726 = vperm.xlu0 %1725, %v983
    %v1727 = vpop.permute.xlu0 %1726
    %1728 = vset.pattern.permute.xlu0 0
    %1729 = vperm.xlu0 %1728, %v984
    %v1730 = vpop.permute.xlu0 %1729
    %1731 = vset.pattern.permute.xlu0 0
    %1732 = vperm.xlu0 %1731, %v985
    %v1733 = vpop.permute.xlu0 %1732
    %1734 = vset.pattern.permute.xlu0 0
    %1735 = vperm.xlu0 %1734, %v986
    %v1736 = vpop.permute.xlu0 %1735
    %1737 = vset.pattern.permute.xlu0 0
    %1738 = vperm.xlu0 %1737, %v987
    %v1739 = vpop.permute.xlu0 %1738
    %1740 = vset.pattern.permute.xlu0 0
    %1741 = vperm.xlu0 %1740, %v988
    %v1742 = vpop.permute.xlu0 %1741
    %1743 = vset.pattern.permute.xlu0 0
    %1744 = vperm.xlu0 %1743, %v989
    %v1745 = vpop.permute.xlu0 %1744
    %1746 = vset.pattern.permute.xlu0 0
    %1747 = vperm.xlu0 %1746, %v990
    %v1748 = vpop.permute.xlu0 %1747
    %1749 = vset.pattern.permute.xlu0 0
    %1750 = vperm.xlu0 %1749, %v991
    %v1751 = vpop.permute.xlu0 %1750
    %1752 = vset.pattern.permute.xlu0 0
    %1753 = vperm.xlu0 %1752, %v992
    %v1754 = vpop.permute.xlu0 %1753
    %1755 = vset.pattern.permute.xlu0 0
    %1756 = vperm.xlu0 %1755, %v993
    %v1757 = vpop.permute.xlu0 %1756
    %1758 = vset.pattern.permute.xlu0 0
    %1759 = vperm.xlu0 %1758, %v994
    %v1760 = vpop.permute.xlu0 %1759
    %1761 = vset.pattern.permute.xlu0 0
    %1762 = vperm.xlu0 %1761, %v995
    %v1763 = vpop.permute.xlu0 %1762
    %1764 = vset.pattern.permute.xlu0 0
    %1765 = vperm.xlu0 %1764, %v996
    %v1766 = vpop.permute.xlu0 %1765
    %1767 = vset.pattern.permute.xlu0 0
    %1768 = vperm.xlu0 %1767, %v997
    %v1769 = vpop.permute.xlu0 %1768
    %1770 = vset.pattern.permute.xlu0 0
    %1771 = vperm.xlu0 %1770, %v998
    %v1772 = vpop.permute.xlu0 %1771
    %1773 = vset.pattern.permute.xlu0 0
    %1774 = vperm.xlu0 %1773, %v999
    %v1775 = vpop.permute.xlu0 %1774
    %1776 = vset.pattern.permute.xlu0 0
    %1777 = vperm.xlu0 %1776, %v1000
    %v1778 = vpop.permute.xlu0 %1777
    %1779 = vset.pattern.permute.xlu0 0
    %1780 = vperm.xlu0 %1779, %v1001
    %v1781 = vpop.permute.xlu0 %1780
    %1782 = vset.pattern.permute.xlu0 0
    %1783 = vperm.xlu0 %1782, %v1002
    %v1784 = vpop.permute.xlu0 %1783
    %1785 = vset.pattern.permute.xlu0 0
    %1786 = vperm.xlu0 %1785, %v1003
    %v1787 = vpop.permute.xlu0 %1786
    %1788 = vset.pattern.permute.xlu0 0
    %1789 = vperm.xlu0 %1788, %v1004
    %v1790 = vpop.permute.xlu0 %1789
    %1791 = vset.pattern.permute.xlu0 0
    %1792 = vperm.xlu0 %1791, %v1005
    %v1793 = vpop.permute.xlu0 %1792
    %1794 = vset.pattern.permute.xlu0 0
    %1795 = vperm.xlu0 %1794, %v1006
    %v1796 = vpop.permute.xlu0 %1795
    %1797 = vset.pattern.permute.xlu0 0
    %1798 = vperm.xlu0 %1797, %v1007
    %v1799 = vpop.permute.xlu0 %1798
    %1800 = vset.pattern.permute.xlu0 0
    %1801 = vperm.xlu0 %1800, %v1008
    %v1802 = vpop.permute.xlu0 %1801
    %1803 = vset.pattern.permute.xlu0 0
    %1804 = vperm.xlu0 %1803, %v1009
    %v1805 = vpop.permute.xlu0 %1804
    %1806 = vset.pattern.permute.xlu0 0
    %1807 = vperm.xlu0 %1806, %v1010
    %v1808 = vpop.permute.xlu0 %1807
    %1809 = vset.pattern.permute.xlu0 0
    %1810 = vperm.xlu0 %1809, %v1011
    %v1811 = vpop.permute.xlu0 %1810
    %1812 = vset.pattern.permute.xlu0 0
    %1813 = vperm.xlu0 %1812, %v1012
    %v1814 = vpop.permute.xlu0 %1813
    %1815 = vset.pattern.permute.xlu0 0
    %1816 = vperm.xlu0 %1815, %v1013
    %v1817 = vpop.permute.xlu0 %1816
    %1818 = vset.pattern.permute.xlu0 0
    %1819 = vperm.xlu0 %1818, %v1014
    %v1820 = vpop.permute.xlu0 %1819
    %1821 = vset.pattern.permute.xlu0 0
    %1822 = vperm.xlu0 %1821, %v1015
    %v1823 = vpop.permute.xlu0 %1822
    %1824 = vset.pattern.permute.xlu0 0
    %1825 = vperm.xlu0 %1824, %v1016
    %v1826 = vpop.permute.xlu0 %1825
    %1827 = vset.pattern.permute.xlu0 0
    %1828 = vperm.xlu0 %1827, %v1017
    %v1829 = vpop.permute.xlu0 %1828
    %1830 = vset.pattern.permute.xlu0 0
    %1831 = vperm.xlu0 %1830, %v1018
    %v1832 = vpop.permute.xlu0 %1831
    %1833 = vset.pattern.permute.xlu0 0
    %1834 = vperm.xlu0 %1833, %v1019
    %v1835 = vpop.permute.xlu0 %1834
    %1836 = vset.pattern.permute.xlu0 0
    %1837 = vperm.xlu0 %1836, %v1020
    %v1838 = vpop.permute.xlu0 %1837
    %1839 = vset.pattern.permute.xlu0 0
    %1840 = vperm.xlu0 %1839, %v1021
    %v1841 = vpop.permute.xlu0 %1840
    %1842 = vset.pattern.permute.xlu0 0
    %1843 = vperm.xlu0 %1842, %v1022
    %v1844 = vpop.permute.xlu0 %1843
    %1845 = vset.pattern.permute.xlu0 0
    %1846 = vperm.xlu0 %1845, %v1023
    %v1847 = vpop.permute.xlu0 %1846
    %1848 = vset.pattern.permute.xlu0 0
    %1849 = vperm.xlu0 %1848, %v1024
    %v1850 = vpop.permute.xlu0 %1849
    %1851 = vset.pattern.permute.xlu0 0
    %1852 = vperm.xlu0 %1851, %v1025
    %v1853 = vpop.permute.xlu0 %1852
    %1854 = vset.pattern.permute.xlu0 0
    %1855 = vperm.xlu0 %1854, %v1026
    %v1856 = vpop.permute.xlu0 %1855
    %1857 = vset.pattern.permute.xlu0 0
    %1858 = vperm.xlu0 %1857, %v1027
    %v1859 = vpop.permute.xlu0 %1858
    %1860 = vset.pattern.permute.xlu0 0
    %1861 = vperm.xlu0 %1860, %v1028
    %v1862 = vpop.permute.xlu0 %1861
    %1863 = vset.pattern.permute.xlu0 0
    %1864 = vperm.xlu0 %1863, %v1029
    %v1865 = vpop.permute.xlu0 %1864
    %1866 = vset.pattern.permute.xlu0 0
    %1867 = vperm.xlu0 %1866, %v1030
    %v1868 = vpop.permute.xlu0 %1867
    %1869 = vset.pattern.permute.xlu0 0
    %1870 = vperm.xlu0 %1869, %v1031
    %v1871 = vpop.permute.xlu0 %1870
    %1872 = vset.pattern.permute.xlu0 0
    %1873 = vperm.xlu0 %1872, %v1032
    %v1874 = vpop.permute.xlu0 %1873
    %1875 = vset.pattern.permute.xlu0 0
    %1876 = vperm.xlu0 %1875, %v1033
    %v1877 = vpop.permute.xlu0 %1876
    %1878 = vset.pattern.permute.xlu0 0
    %1879 = vperm.xlu0 %1878, %v1034
    %v1880 = vpop.permute.xlu0 %1879
    %1881 = vset.pattern.permute.xlu0 0
    %1882 = vperm.xlu0 %1881, %v1035
    %v1883 = vpop.permute.xlu0 %1882
    %1884 = vset.pattern.permute.xlu0 0
    %1885 = vperm.xlu0 %1884, %v1036
    %v1886 = vpop.permute.xlu0 %1885
    %1887 = vset.pattern.permute.xlu0 0
    %1888 = vperm.xlu0 %1887, %v1037
    %v1889 = vpop.permute.xlu0 %1888
    %1890 = vset.pattern.permute.xlu0 0
    %1891 = vperm.xlu0 %1890, %v1038
    %v1892 = vpop.permute.xlu0 %1891
    %1893 = vset.pattern.permute.xlu0 0
    %1894 = vperm.xlu0 %1893, %v1039
    %v1895 = vpop.permute.xlu0 %1894
    %1896 = vset.pattern.permute.xlu0 0
    %1897 = vperm.xlu0 %1896, %v1040
    %v1898 = vpop.permute.xlu0 %1897
    %1899 = vset.pattern.permute.xlu0 0
    %1900 = vperm.xlu0 %1899, %v1041
    %v1901 = vpop.permute.xlu0 %1900
    %1902 = vset.pattern.permute.xlu0 0
    %1903 = vperm.xlu0 %1902, %v1042
    %v1904 = vpop.permute.xlu0 %1903
    %1905 = vset.pattern.permute.xlu0 0
    %1906 = vperm.xlu0 %1905, %v1043
    %v1907 = vpop.permute.xlu0 %1906
    %1908 = vset.pattern.permute.xlu0 0
    %1909 = vperm.xlu0 %1908, %v1044
    %v1910 = vpop.permute.xlu0 %1909
    %1911 = vset.pattern.permute.xlu0 0
    %1912 = vperm.xlu0 %1911, %v1045
    %v1913 = vpop.permute.xlu0 %1912
    %1914 = vset.pattern.permute.xlu0 0
    %1915 = vperm.xlu0 %1914, %v1046
    %v1916 = vpop.permute.xlu0 %1915
    %1917 = vset.pattern.permute.xlu0 0
    %1918 = vperm.xlu0 %1917, %v1047
    %v1919 = vpop.permute.xlu0 %1918
    %1920 = vset.pattern.permute.xlu0 0
    %1921 = vperm.xlu0 %1920, %v1048
    %v1922 = vpop.permute.xlu0 %1921
    %1923 = vset.pattern.permute.xlu0 0
    %1924 = vperm.xlu0 %1923, %v1049
    %v1925 = vpop.permute.xlu0 %1924
    %1926 = vset.pattern.permute.xlu0 0
    %1927 = vperm.xlu0 %1926, %v1050
    %v1928 = vpop.permute.xlu0 %1927
    %1929 = vset.pattern.permute.xlu0 0
    %1930 = vperm.xlu0 %1929, %v1051
    %v1931 = vpop.permute.xlu0 %1930
    %1932 = vset.pattern.permute.xlu0 0
    %1933 = vperm.xlu0 %1932, %v1052
    %v1934 = vpop.permute.xlu0 %1933
    %1935 = vset.pattern.permute.xlu0 0
    %1936 = vperm.xlu0 %1935, %v1053
    %v1937 = vpop.permute.xlu0 %1936
    %1938 = vset.pattern.permute.xlu0 0
    %1939 = vperm.xlu0 %1938, %v1054
    %v1940 = vpop.permute.xlu0 %1939
    %1941 = vset.pattern.permute.xlu0 0
    %1942 = vperm.xlu0 %1941, %v1055
    %v1943 = vpop.permute.xlu0 %1942
    %1944 = vset.pattern.permute.xlu0 0
    %1945 = vperm.xlu0 %1944, %v1056
    %v1946 = vpop.permute.xlu0 %1945
    %1947 = vset.pattern.permute.xlu0 0
    %1948 = vperm.xlu0 %1947, %v1057
    %v1949 = vpop.permute.xlu0 %1948
    %1950 = vset.pattern.permute.xlu0 0
    %1951 = vperm.xlu0 %1950, %v1058
    %v1952 = vpop.permute.xlu0 %1951
    %1953 = vset.pattern.permute.xlu0 0
    %1954 = vperm.xlu0 %1953, %v1059
    %v1955 = vpop.permute.xlu0 %1954
    %1956 = vset.pattern.permute.xlu0 0
    %1957 = vperm.xlu0 %1956, %v1060
    %v1958 = vpop.permute.xlu0 %1957
    %1959 = vset.pattern.permute.xlu0 0
    %1960 = vperm.xlu0 %1959, %v1061
    %v1961 = vpop.permute.xlu0 %1960
    %1962 = vset.pattern.permute.xlu0 0
    %1963 = vperm.xlu0 %1962, %v1062
    %v1964 = vpop.permute.xlu0 %1963
    %1965 = vset.pattern.permute.xlu0 0
    %1966 = vperm.xlu0 %1965, %v1063
    %v1967 = vpop.permute.xlu0 %1966
    %1968 = vset.pattern.permute.xlu0 0
    %1969 = vperm.xlu0 %1968, %v1064
    %v1970 = vpop.permute.xlu0 %1969
    %1971 = vset.pattern.permute.xlu0 0
    %1972 = vperm.xlu0 %1971, %v1065
    %v1973 = vpop.permute.xlu0 %1972
    %1974 = vset.pattern.permute.xlu0 0
    %1975 = vperm.xlu0 %1974, %v1066
    %v1976 = vpop.permute.xlu0 %1975
    %1977 = vset.pattern.permute.xlu0 0
    %1978 = vperm.xlu0 %1977, %v1067
    %v1979 = vpop.permute.xlu0 %1978
    %1980 = vset.pattern.permute.xlu0 0
    %1981 = vperm.xlu0 %1980, %v1068
    %v1982 = vpop.permute.xlu0 %1981
    %1983 = vset.pattern.permute.xlu0 0
    %1984 = vperm.xlu0 %1983, %v1069
    %v1985 = vpop.permute.xlu0 %1984
    %1986 = vset.pattern.permute.xlu0 0
    %1987 = vperm.xlu0 %1986, %v1070
    %v1988 = vpop.permute.xlu0 %1987
    %1989 = vset.pattern.permute.xlu0 0
    %1990 = vperm.xlu0 %1989, %v1071
    %v1991 = vpop.permute.xlu0 %1990
    %1992 = vset.pattern.permute.xlu0 0
    %1993 = vperm.xlu0 %1992, %v1072
    %v1994 = vpop.permute.xlu0 %1993
    %1995 = vset.pattern.permute.xlu0 0
    %1996 = vperm.xlu0 %1995, %v1073
    %v1997 = vpop.permute.xlu0 %1996
    %1998 = vset.pattern.permute.xlu0 0
    %1999 = vperm.xlu0 %1998, %v1074
    %v2000 = vpop.permute.xlu0 %1999
    %2001 = vset.pattern.permute.xlu0 0
    %2002 = vperm.xlu0 %2001, %v1075
    %v2003 = vpop.permute.xlu0 %2002
    %2004 = vset.pattern.permute.xlu0 0
    %2005 = vperm.xlu0 %2004, %v1076
    %v2006 = vpop.permute.xlu0 %2005
    %2007 = vset.pattern.permute.xlu0 0
    %2008 = vperm.xlu0 %2007, %v1077
    %v2009 = vpop.permute.xlu0 %2008
    %2010 = vset.pattern.permute.xlu0 0
    %2011 = vperm.xlu0 %2010, %v1078
    %v2012 = vpop.permute.xlu0 %2011
    %2013 = vset.pattern.permute.xlu0 0
    %2014 = vperm.xlu0 %2013, %v1079
    %v2015 = vpop.permute.xlu0 %2014
    %2016 = vset.pattern.permute.xlu0 0
    %2017 = vperm.xlu0 %2016, %v1080
    %v2018 = vpop.permute.xlu0 %2017
    %2019 = vset.pattern.permute.xlu0 0
    %2020 = vperm.xlu0 %2019, %v1081
    %v2021 = vpop.permute.xlu0 %2020
    %2022 = vset.pattern.permute.xlu0 0
    %2023 = vperm.xlu0 %2022, %v1082
    %v2024 = vpop.permute.xlu0 %2023
    %2025 = vset.pattern.permute.xlu0 0
    %2026 = vperm.xlu0 %2025, %v1083
    %v2027 = vpop.permute.xlu0 %2026
    %2028 = vset.pattern.permute.xlu0 0
    %2029 = vperm.xlu0 %2028, %v1084
    %v2030 = vpop.permute.xlu0 %2029
    %2031 = vset.pattern.permute.xlu0 0
    %2032 = vperm.xlu0 %2031, %v1085
    %v2033 = vpop.permute.xlu0 %2032
    %2034 = vset.pattern.permute.xlu0 0
    %2035 = vperm.xlu0 %2034, %v1086
    %v2036 = vpop.permute.xlu0 %2035
    %2037 = vset.pattern.permute.xlu0 0
    %2038 = vperm.xlu0 %2037, %v1087
    %v2039 = vpop.permute.xlu0 %2038
    %2040 = vset.pattern.permute.xlu0 0
    %2041 = vperm.xlu0 %2040, %v1088
    %v2042 = vpop.permute.xlu0 %2041
    %2043 = vset.pattern.permute.xlu0 0
    %2044 = vperm.xlu0 %2043, %v1089
    %v2045 = vpop.permute.xlu0 %2044
    %2046 = vset.pattern.permute.xlu0 0
    %2047 = vperm.xlu0 %2046, %v1090
    %v2048 = vpop.permute.xlu0 %2047
    %2049 = vset.pattern.permute.xlu0 0
    %2050 = vperm.xlu0 %2049, %v1091
    %v2051 = vpop.permute.xlu0 %2050
    %2052 = vset.pattern.permute.xlu0 0
    %2053 = vperm.xlu0 %2052, %v1092
    %v2054 = vpop.permute.xlu0 %2053
    %2055 = vset.pattern.permute.xlu0 0
    %2056 = vperm.xlu0 %2055, %v1093
    %v2057 = vpop.permute.xlu0 %2056
    %2058 = vset.pattern.permute.xlu0 0
    %2059 = vperm.xlu0 %2058, %v1094
    %v2060 = vpop.permute.xlu0 %2059
    %2061 = vset.pattern.permute.xlu0 0
    %2062 = vperm.xlu0 %2061, %v1095
    %v2063 = vpop.permute.xlu0 %2062
    %2064 = vset.pattern.permute.xlu0 0
    %2065 = vperm.xlu0 %2064, %v1096
    %v2066 = vpop.permute.xlu0 %2065
    %2067 = vset.pattern.permute.xlu0 0
    %2068 = vperm.xlu0 %2067, %v1097
    %v2069 = vpop.permute.xlu0 %2068
    %2070 = vset.pattern.permute.xlu0 0
    %2071 = vperm.xlu0 %2070, %v1098
    %v2072 = vpop.permute.xlu0 %2071
    %2073 = vset.pattern.permute.xlu0 0
    %2074 = vperm.xlu0 %2073, %v1099
    %v2075 = vpop.permute.xlu0 %2074
    %2076 = vset.pattern.permute.xlu0 0
    %2077 = vperm.xlu0 %2076, %v1100
    %v2078 = vpop.permute.xlu0 %2077
    %2079 = vset.pattern.permute.xlu0 0
    %2080 = vperm.xlu0 %2079, %v1101
    %v2081 = vpop.permute.xlu0 %2080
    %2082 = vset.pattern.permute.xlu0 0
    %2083 = vperm.xlu0 %2082, %v1102
    %v2084 = vpop.permute.xlu0 %2083
    %2085 = vset.pattern.permute.xlu0 0
    %2086 = vperm.xlu0 %2085, %v1103
    %v2087 = vpop.permute.xlu0 %2086
    %2088 = vset.pattern.permute.xlu0 0
    %2089 = vperm.xlu0 %2088, %v1104
    %v2090 = vpop.permute.xlu0 %2089
    %2091 = vset.pattern.permute.xlu0 0
    %2092 = vperm.xlu0 %2091, %v1105
    %v2093 = vpop.permute.xlu0 %2092
    %2094 = vset.pattern.permute.xlu0 0
    %2095 = vperm.xlu0 %2094, %v1106
    %v2096 = vpop.permute.xlu0 %2095
    %2097 = vset.pattern.permute.xlu0 0
    %2098 = vperm.xlu0 %2097, %v1107
    %v2099 = vpop.permute.xlu0 %2098
    %2100 = vset.pattern.permute.xlu0 0
    %2101 = vperm.xlu0 %2100, %v1108
    %v2102 = vpop.permute.xlu0 %2101
    %2103 = vset.pattern.permute.xlu0 0
    %2104 = vperm.xlu0 %2103, %v1109
    %v2105 = vpop.permute.xlu0 %2104
    %2106 = vset.pattern.permute.xlu0 0
    %2107 = vperm.xlu0 %2106, %v1110
    %v2108 = vpop.permute.xlu0 %2107
    %2109 = vset.pattern.permute.xlu0 0
    %2110 = vperm.xlu0 %2109, %v1111
    %v2111 = vpop.permute.xlu0 %2110
    %2112 = vset.pattern.permute.xlu0 0
    %2113 = vperm.xlu0 %2112, %v1112
    %v2114 = vpop.permute.xlu0 %2113
    %2115 = vset.pattern.permute.xlu0 0
    %2116 = vperm.xlu0 %2115, %v1113
    %v2117 = vpop.permute.xlu0 %2116
    %2118 = vset.pattern.permute.xlu0 0
    %2119 = vperm.xlu0 %2118, %v1114
    %v2120 = vpop.permute.xlu0 %2119
    %2121 = vset.pattern.permute.xlu0 0
    %2122 = vperm.xlu0 %2121, %v1115
    %v2123 = vpop.permute.xlu0 %2122
    %2124 = vset.pattern.permute.xlu0 0
    %2125 = vperm.xlu0 %2124, %v1116
    %v2126 = vpop.permute.xlu0 %2125
    %2127 = vset.pattern.permute.xlu0 0
    %2128 = vperm.xlu0 %2127, %v1117
    %v2129 = vpop.permute.xlu0 %2128
    %2130 = vset.pattern.permute.xlu0 0
    %2131 = vperm.xlu0 %2130, %v1118
    %v2132 = vpop.permute.xlu0 %2131
    %2133 = vset.pattern.permute.xlu0 0
    %2134 = vperm.xlu0 %2133, %v1119
    %v2135 = vpop.permute.xlu0 %2134
    %2136 = vset.pattern.permute.xlu0 0
    %2137 = vperm.xlu0 %2136, %v1120
    %v2138 = vpop.permute.xlu0 %2137
    %2139 = vset.pattern.permute.xlu0 0
    %2140 = vperm.xlu0 %2139, %v1121
    %v2141 = vpop.permute.xlu0 %2140
    %2142 = vset.pattern.permute.xlu0 0
    %2143 = vperm.xlu0 %2142, %v1122
    %v2144 = vpop.permute.xlu0 %2143
    %2145 = vset.pattern.permute.xlu0 0
    %2146 = vperm.xlu0 %2145, %v1123
    %v2147 = vpop.permute.xlu0 %2146
    %v2148 = vlaneseq
    %v2149 = vshrl.u32 %v2148, 7
    %v2150 = vsub.s32 %v55, %v2149
    %v2151 = vrot.slane %v1382, %v2150
    %v2152 = vadd.s32 %v55, 4294967288
    %v2153 = vlaneseq
    %v2154 = vshrl.u32 %v2153, 7
    %v2155 = vsub.s32 %v2152, %v2154
    %v2156 = vrot.slane %v1385, %v2155
    %vm2157 = vcmask 130112
    %v2158 = vsel %vm2157, %v2156, %v2151
    %v2159 = vadd.s32 %v55, 4294967280
    %v2160 = vlaneseq
    %v2161 = vshrl.u32 %v2160, 7
    %v2162 = vsub.s32 %v2159, %v2161
    %v2163 = vrot.slane %v1388, %v2162
    %vm2164 = vcmask 195712
    %v2165 = vsel %vm2164, %v2163, %v2158
    %v2166 = vadd.s32 %v55, 4294967272
    %v2167 = vlaneseq
    %v2168 = vshrl.u32 %v2167, 7
    %v2169 = vsub.s32 %v2166, %v2168
    %v2170 = vrot.slane %v1391, %v2169
    %vm2171 = vcmask 261312
    %v2172 = vsel %vm2171, %v2170, %v2165
    %v2173 = vlaneseq
    %v2174 = vshrl.u32 %v2173, 7
    %v2175 = vsub.s32 %v55, %v2174
    %v2176 = vrot.slane %v1394, %v2175
    %v2177 = vlaneseq
    %v2178 = vshrl.u32 %v2177, 7
    %v2179 = vsub.s32 %v2152, %v2178
    %v2180 = vrot.slane %v1397, %v2179
    %v2181 = vsel %vm2157, %v2180, %v2176
    %v2182 = vlaneseq
    %v2183 = vshrl.u32 %v2182, 7
    %v2184 = vsub.s32 %v2159, %v2183
    %v2185 = vrot.slane %v1400, %v2184
    %v2186 = vsel %vm2164, %v2185, %v2181
    %v2187 = vlaneseq
    %v2188 = vshrl.u32 %v2187, 7
    %v2189 = vsub.s32 %v2166, %v2188
    %v2190 = vrot.slane %v1403, %v2189
    %v2191 = vsel %vm2171, %v2190, %v2186
    %v2192 = vlaneseq
    %v2193 = vshrl.u32 %v2192, 7
    %v2194 = vsub.s32 %v55, %v2193
    %v2195 = vrot.slane %v1406, %v2194
    %v2196 = vlaneseq
    %v2197 = vshrl.u32 %v2196, 7
    %v2198 = vsub.s32 %v2152, %v2197
    %v2199 = vrot.slane %v1409, %v2198
    %v2200 = vsel %vm2157, %v2199, %v2195
    %v2201 = vlaneseq
    %v2202 = vshrl.u32 %v2201, 7
    %v2203 = vsub.s32 %v2159, %v2202
    %v2204 = vrot.slane %v1412, %v2203
    %v2205 = vsel %vm2164, %v2204, %v2200
    %v2206 = vlaneseq
    %v2207 = vshrl.u32 %v2206, 7
    %v2208 = vsub.s32 %v2166, %v2207
    %v2209 = vrot.slane %v1415, %v2208
    %v2210 = vsel %vm2171, %v2209, %v2205
    %v2211 = vlaneseq
    %v2212 = vshrl.u32 %v2211, 7
    %v2213 = vsub.s32 %v55, %v2212
    %v2214 = vrot.slane %v1418, %v2213
    %v2215 = vlaneseq
    %v2216 = vshrl.u32 %v2215, 7
    %v2217 = vsub.s32 %v2152, %v2216
    %v2218 = vrot.slane %v1421, %v2217
    %v2219 = vsel %vm2157, %v2218, %v2214
    %v2220 = vlaneseq
    %v2221 = vshrl.u32 %v2220, 7
    %v2222 = vsub.s32 %v2159, %v2221
    %v2223 = vrot.slane %v1424, %v2222
    %v2224 = vsel %vm2164, %v2223, %v2219
    %v2225 = vlaneseq
    %v2226 = vshrl.u32 %v2225, 7
    %v2227 = vsub.s32 %v2166, %v2226
    %v2228 = vrot.slane %v1427, %v2227
    %v2229 = vsel %vm2171, %v2228, %v2224
    %v2230 = vlaneseq
    %v2231 = vshrl.u32 %v2230, 7
    %v2232 = vsub.s32 %v55, %v2231
    %v2233 = vrot.slane %v1430, %v2232
    %v2234 = vlaneseq
    %v2235 = vshrl.u32 %v2234, 7
    %v2236 = vsub.s32 %v2152, %v2235
    %v2237 = vrot.slane %v1433, %v2236
    %v2238 = vsel %vm2157, %v2237, %v2233
    %v2239 = vlaneseq
    %v2240 = vshrl.u32 %v2239, 7
    %v2241 = vsub.s32 %v2159, %v2240
    %v2242 = vrot.slane %v1436, %v2241
    %v2243 = vsel %vm2164, %v2242, %v2238
    %v2244 = vlaneseq
    %v2245 = vshrl.u32 %v2244, 7
    %v2246 = vsub.s32 %v2166, %v2245
    %v2247 = vrot.slane %v1439, %v2246
    %v2248 = vsel %vm2171, %v2247, %v2243
    %v2249 = vlaneseq
    %v2250 = vshrl.u32 %v2249, 7
    %v2251 = vsub.s32 %v55, %v2250
    %v2252 = vrot.slane %v1442, %v2251
    %v2253 = vlaneseq
    %v2254 = vshrl.u32 %v2253, 7
    %v2255 = vsub.s32 %v2152, %v2254
    %v2256 = vrot.slane %v1445, %v2255
    %v2257 = vsel %vm2157, %v2256, %v2252
    %v2258 = vlaneseq
    %v2259 = vshrl.u32 %v2258, 7
    %v2260 = vsub.s32 %v2159, %v2259
    %v2261 = vrot.slane %v1448, %v2260
    %v2262 = vsel %vm2164, %v2261, %v2257
    %v2263 = vlaneseq
    %v2264 = vshrl.u32 %v2263, 7
    %v2265 = vsub.s32 %v2166, %v2264
    %v2266 = vrot.slane %v1451, %v2265
    %v2267 = vsel %vm2171, %v2266, %v2262
    %v2268 = vlaneseq
    %v2269 = vshrl.u32 %v2268, 7
    %v2270 = vsub.s32 %v55, %v2269
    %v2271 = vrot.slane %v1454, %v2270
    %v2272 = vlaneseq
    %v2273 = vshrl.u32 %v2272, 7
    %v2274 = vsub.s32 %v2152, %v2273
    %v2275 = vrot.slane %v1457, %v2274
    %v2276 = vsel %vm2157, %v2275, %v2271
    %v2277 = vlaneseq
    %v2278 = vshrl.u32 %v2277, 7
    %v2279 = vsub.s32 %v2159, %v2278
    %v2280 = vrot.slane %v1460, %v2279
    %v2281 = vsel %vm2164, %v2280, %v2276
    %v2282 = vlaneseq
    %v2283 = vshrl.u32 %v2282, 7
    %v2284 = vsub.s32 %v2166, %v2283
    %v2285 = vrot.slane %v1463, %v2284
    %v2286 = vsel %vm2171, %v2285, %v2281
    %v2287 = vlaneseq
    %v2288 = vshrl.u32 %v2287, 7
    %v2289 = vsub.s32 %v55, %v2288
    %v2290 = vrot.slane %v1466, %v2289
    %v2291 = vlaneseq
    %v2292 = vshrl.u32 %v2291, 7
    %v2293 = vsub.s32 %v2152, %v2292
    %v2294 = vrot.slane %v1469, %v2293
    %v2295 = vsel %vm2157, %v2294, %v2290
    %v2296 = vlaneseq
    %v2297 = vshrl.u32 %v2296, 7
    %v2298 = vsub.s32 %v2159, %v2297
    %v2299 = vrot.slane %v1472, %v2298
    %v2300 = vsel %vm2164, %v2299, %v2295
    %v2301 = vlaneseq
    %v2302 = vshrl.u32 %v2301, 7
    %v2303 = vsub.s32 %v2166, %v2302
    %v2304 = vrot.slane %v1475, %v2303
    %v2305 = vsel %vm2171, %v2304, %v2300
    %v2306 = vlaneseq
    %v2307 = vshrl.u32 %v2306, 7
    %v2308 = vsub.s32 %v55, %v2307
    %v2309 = vrot.slane %v1478, %v2308
    %v2310 = vlaneseq
    %v2311 = vshrl.u32 %v2310, 7
    %v2312 = vsub.s32 %v2152, %v2311
    %v2313 = vrot.slane %v1481, %v2312
    %v2314 = vsel %vm2157, %v2313, %v2309
    %v2315 = vlaneseq
    %v2316 = vshrl.u32 %v2315, 7
    %v2317 = vsub.s32 %v2159, %v2316
    %v2318 = vrot.slane %v1484, %v2317
    %v2319 = vsel %vm2164, %v2318, %v2314
    %v2320 = vlaneseq
    %v2321 = vshrl.u32 %v2320, 7
    %v2322 = vsub.s32 %v2166, %v2321
    %v2323 = vrot.slane %v1487, %v2322
    %v2324 = vsel %vm2171, %v2323, %v2319
    %v2325 = vlaneseq
    %v2326 = vshrl.u32 %v2325, 7
    %v2327 = vsub.s32 %v55, %v2326
    %v2328 = vrot.slane %v1490, %v2327
    %v2329 = vlaneseq
    %v2330 = vshrl.u32 %v2329, 7
    %v2331 = vsub.s32 %v2152, %v2330
    %v2332 = vrot.slane %v1493, %v2331
    %v2333 = vsel %vm2157, %v2332, %v2328
    %v2334 = vlaneseq
    %v2335 = vshrl.u32 %v2334, 7
    %v2336 = vsub.s32 %v2159, %v2335
    %v2337 = vrot.slane %v1496, %v2336
    %v2338 = vsel %vm2164, %v2337, %v2333
    %v2339 = vlaneseq
    %v2340 = vshrl.u32 %v2339, 7
    %v2341 = vsub.s32 %v2166, %v2340
    %v2342 = vrot.slane %v1499, %v2341
    %v2343 = vsel %vm2171, %v2342, %v2338
    %v2344 = vlaneseq
    %v2345 = vshrl.u32 %v2344, 7
    %v2346 = vsub.s32 %v55, %v2345
    %v2347 = vrot.slane %v1502, %v2346
    %v2348 = vlaneseq
    %v2349 = vshrl.u32 %v2348, 7
    %v2350 = vsub.s32 %v2152, %v2349
    %v2351 = vrot.slane %v1505, %v2350
    %v2352 = vsel %vm2157, %v2351, %v2347
    %v2353 = vlaneseq
    %v2354 = vshrl.u32 %v2353, 7
    %v2355 = vsub.s32 %v2159, %v2354
    %v2356 = vrot.slane %v1508, %v2355
    %v2357 = vsel %vm2164, %v2356, %v2352
    %v2358 = vlaneseq
    %v2359 = vshrl.u32 %v2358, 7
    %v2360 = vsub.s32 %v2166, %v2359
    %v2361 = vrot.slane %v1511, %v2360
    %v2362 = vsel %vm2171, %v2361, %v2357
    %v2363 = vlaneseq
    %v2364 = vshrl.u32 %v2363, 7
    %v2365 = vsub.s32 %v55, %v2364
    %v2366 = vrot.slane %v1514, %v2365
    %v2367 = vlaneseq
    %v2368 = vshrl.u32 %v2367, 7
    %v2369 = vsub.s32 %v2152, %v2368
    %v2370 = vrot.slane %v1517, %v2369
    %v2371 = vsel %vm2157, %v2370, %v2366
    %v2372 = vlaneseq
    %v2373 = vshrl.u32 %v2372, 7
    %v2374 = vsub.s32 %v2159, %v2373
    %v2375 = vrot.slane %v1520, %v2374
    %v2376 = vsel %vm2164, %v2375, %v2371
    %v2377 = vlaneseq
    %v2378 = vshrl.u32 %v2377, 7
    %v2379 = vsub.s32 %v2166, %v2378
    %v2380 = vrot.slane %v1523, %v2379
    %v2381 = vsel %vm2171, %v2380, %v2376
    %v2382 = vlaneseq
    %v2383 = vshrl.u32 %v2382, 7
    %v2384 = vsub.s32 %v55, %v2383
    %v2385 = vrot.slane %v1526, %v2384
    %v2386 = vlaneseq
    %v2387 = vshrl.u32 %v2386, 7
    %v2388 = vsub.s32 %v2152, %v2387
    %v2389 = vrot.slane %v1529, %v2388
    %v2390 = vsel %vm2157, %v2389, %v2385
    %v2391 = vlaneseq
    %v2392 = vshrl.u32 %v2391, 7
    %v2393 = vsub.s32 %v2159, %v2392
    %v2394 = vrot.slane %v1532, %v2393
    %v2395 = vsel %vm2164, %v2394, %v2390
    %v2396 = vlaneseq
    %v2397 = vshrl.u32 %v2396, 7
    %v2398 = vsub.s32 %v2166, %v2397
    %v2399 = vrot.slane %v1535, %v2398
    %v2400 = vsel %vm2171, %v2399, %v2395
    %v2401 = vlaneseq
    %v2402 = vshrl.u32 %v2401, 7
    %v2403 = vsub.s32 %v55, %v2402
    %v2404 = vrot.slane %v1538, %v2403
    %v2405 = vlaneseq
    %v2406 = vshrl.u32 %v2405, 7
    %v2407 = vsub.s32 %v2152, %v2406
    %v2408 = vrot.slane %v1541, %v2407
    %v2409 = vsel %vm2157, %v2408, %v2404
    %v2410 = vlaneseq
    %v2411 = vshrl.u32 %v2410, 7
    %v2412 = vsub.s32 %v2159, %v2411
    %v2413 = vrot.slane %v1544, %v2412
    %v2414 = vsel %vm2164, %v2413, %v2409
    %v2415 = vlaneseq
    %v2416 = vshrl.u32 %v2415, 7
    %v2417 = vsub.s32 %v2166, %v2416
    %v2418 = vrot.slane %v1547, %v2417
    %v2419 = vsel %vm2171, %v2418, %v2414
    %v2420 = vlaneseq
    %v2421 = vshrl.u32 %v2420, 7
    %v2422 = vsub.s32 %v55, %v2421
    %v2423 = vrot.slane %v1550, %v2422
    %v2424 = vlaneseq
    %v2425 = vshrl.u32 %v2424, 7
    %v2426 = vsub.s32 %v2152, %v2425
    %v2427 = vrot.slane %v1553, %v2426
    %v2428 = vsel %vm2157, %v2427, %v2423
    %v2429 = vlaneseq
    %v2430 = vshrl.u32 %v2429, 7
    %v2431 = vsub.s32 %v2159, %v2430
    %v2432 = vrot.slane %v1556, %v2431
    %v2433 = vsel %vm2164, %v2432, %v2428
    %v2434 = vlaneseq
    %v2435 = vshrl.u32 %v2434, 7
    %v2436 = vsub.s32 %v2166, %v2435
    %v2437 = vrot.slane %v1559, %v2436
    %v2438 = vsel %vm2171, %v2437, %v2433
    %v2439 = vlaneseq
    %v2440 = vshrl.u32 %v2439, 7
    %v2441 = vsub.s32 %v55, %v2440
    %v2442 = vrot.slane %v1562, %v2441
    %v2443 = vlaneseq
    %v2444 = vshrl.u32 %v2443, 7
    %v2445 = vsub.s32 %v2152, %v2444
    %v2446 = vrot.slane %v1565, %v2445
    %v2447 = vsel %vm2157, %v2446, %v2442
    %v2448 = vlaneseq
    %v2449 = vshrl.u32 %v2448, 7
    %v2450 = vsub.s32 %v2159, %v2449
    %v2451 = vrot.slane %v1568, %v2450
    %v2452 = vsel %vm2164, %v2451, %v2447
    %v2453 = vlaneseq
    %v2454 = vshrl.u32 %v2453, 7
    %v2455 = vsub.s32 %v2166, %v2454
    %v2456 = vrot.slane %v1571, %v2455
    %v2457 = vsel %vm2171, %v2456, %v2452
    %v2458 = vlaneseq
    %v2459 = vshrl.u32 %v2458, 7
    %v2460 = vsub.s32 %v55, %v2459
    %v2461 = vrot.slane %v1574, %v2460
    %v2462 = vlaneseq
    %v2463 = vshrl.u32 %v2462, 7
    %v2464 = vsub.s32 %v2152, %v2463
    %v2465 = vrot.slane %v1577, %v2464
    %v2466 = vsel %vm2157, %v2465, %v2461
    %v2467 = vlaneseq
    %v2468 = vshrl.u32 %v2467, 7
    %v2469 = vsub.s32 %v2159, %v2468
    %v2470 = vrot.slane %v1580, %v2469
    %v2471 = vsel %vm2164, %v2470, %v2466
    %v2472 = vlaneseq
    %v2473 = vshrl.u32 %v2472, 7
    %v2474 = vsub.s32 %v2166, %v2473
    %v2475 = vrot.slane %v1583, %v2474
    %v2476 = vsel %vm2171, %v2475, %v2471
    %v2477 = vlaneseq
    %v2478 = vshrl.u32 %v2477, 7
    %v2479 = vsub.s32 %v55, %v2478
    %v2480 = vrot.slane %v1586, %v2479
    %v2481 = vlaneseq
    %v2482 = vshrl.u32 %v2481, 7
    %v2483 = vsub.s32 %v2152, %v2482
    %v2484 = vrot.slane %v1589, %v2483
    %v2485 = vsel %vm2157, %v2484, %v2480
    %v2486 = vlaneseq
    %v2487 = vshrl.u32 %v2486, 7
    %v2488 = vsub.s32 %v2159, %v2487
    %v2489 = vrot.slane %v1592, %v2488
    %v2490 = vsel %vm2164, %v2489, %v2485
    %v2491 = vlaneseq
    %v2492 = vshrl.u32 %v2491, 7
    %v2493 = vsub.s32 %v2166, %v2492
    %v2494 = vrot.slane %v1595, %v2493
    %v2495 = vsel %vm2171, %v2494, %v2490
    %v2496 = vlaneseq
    %v2497 = vshrl.u32 %v2496, 7
    %v2498 = vsub.s32 %v55, %v2497
    %v2499 = vrot.slane %v1598, %v2498
    %v2500 = vlaneseq
    %v2501 = vshrl.u32 %v2500, 7
    %v2502 = vsub.s32 %v2152, %v2501
    %v2503 = vrot.slane %v1601, %v2502
    %v2504 = vsel %vm2157, %v2503, %v2499
    %v2505 = vlaneseq
    %v2506 = vshrl.u32 %v2505, 7
    %v2507 = vsub.s32 %v2159, %v2506
    %v2508 = vrot.slane %v1604, %v2507
    %v2509 = vsel %vm2164, %v2508, %v2504
    %v2510 = vlaneseq
    %v2511 = vshrl.u32 %v2510, 7
    %v2512 = vsub.s32 %v2166, %v2511
    %v2513 = vrot.slane %v1607, %v2512
    %v2514 = vsel %vm2171, %v2513, %v2509
    %v2515 = vlaneseq
    %v2516 = vshrl.u32 %v2515, 7
    %v2517 = vsub.s32 %v55, %v2516
    %v2518 = vrot.slane %v1610, %v2517
    %v2519 = vlaneseq
    %v2520 = vshrl.u32 %v2519, 7
    %v2521 = vsub.s32 %v2152, %v2520
    %v2522 = vrot.slane %v1613, %v2521
    %v2523 = vsel %vm2157, %v2522, %v2518
    %v2524 = vlaneseq
    %v2525 = vshrl.u32 %v2524, 7
    %v2526 = vsub.s32 %v2159, %v2525
    %v2527 = vrot.slane %v1616, %v2526
    %v2528 = vsel %vm2164, %v2527, %v2523
    %v2529 = vlaneseq
    %v2530 = vshrl.u32 %v2529, 7
    %v2531 = vsub.s32 %v2166, %v2530
    %v2532 = vrot.slane %v1619, %v2531
    %v2533 = vsel %vm2171, %v2532, %v2528
    %v2534 = vlaneseq
    %v2535 = vshrl.u32 %v2534, 7
    %v2536 = vsub.s32 %v55, %v2535
    %v2537 = vrot.slane %v1622, %v2536
    %v2538 = vlaneseq
    %v2539 = vshrl.u32 %v2538, 7
    %v2540 = vsub.s32 %v2152, %v2539
    %v2541 = vrot.slane %v1625, %v2540
    %v2542 = vsel %vm2157, %v2541, %v2537
    %v2543 = vlaneseq
    %v2544 = vshrl.u32 %v2543, 7
    %v2545 = vsub.s32 %v2159, %v2544
    %v2546 = vrot.slane %v1628, %v2545
    %v2547 = vsel %vm2164, %v2546, %v2542
    %v2548 = vlaneseq
    %v2549 = vshrl.u32 %v2548, 7
    %v2550 = vsub.s32 %v2166, %v2549
    %v2551 = vrot.slane %v1631, %v2550
    %v2552 = vsel %vm2171, %v2551, %v2547
    %v2553 = vlaneseq
    %v2554 = vshrl.u32 %v2553, 7
    %v2555 = vsub.s32 %v55, %v2554
    %v2556 = vrot.slane %v1634, %v2555
    %v2557 = vlaneseq
    %v2558 = vshrl.u32 %v2557, 7
    %v2559 = vsub.s32 %v2152, %v2558
    %v2560 = vrot.slane %v1637, %v2559
    %v2561 = vsel %vm2157, %v2560, %v2556
    %v2562 = vlaneseq
    %v2563 = vshrl.u32 %v2562, 7
    %v2564 = vsub.s32 %v2159, %v2563
    %v2565 = vrot.slane %v1640, %v2564
    %v2566 = vsel %vm2164, %v2565, %v2561
    %v2567 = vlaneseq
    %v2568 = vshrl.u32 %v2567, 7
    %v2569 = vsub.s32 %v2166, %v2568
    %v2570 = vrot.slane %v1643, %v2569
    %v2571 = vsel %vm2171, %v2570, %v2566
    %v2572 = vlaneseq
    %v2573 = vshrl.u32 %v2572, 7
    %v2574 = vsub.s32 %v55, %v2573
    %v2575 = vrot.slane %v1646, %v2574
    %v2576 = vlaneseq
    %v2577 = vshrl.u32 %v2576, 7
    %v2578 = vsub.s32 %v2152, %v2577
    %v2579 = vrot.slane %v1649, %v2578
    %v2580 = vsel %vm2157, %v2579, %v2575
    %v2581 = vlaneseq
    %v2582 = vshrl.u32 %v2581, 7
    %v2583 = vsub.s32 %v2159, %v2582
    %v2584 = vrot.slane %v1652, %v2583
    %v2585 = vsel %vm2164, %v2584, %v2580
    %v2586 = vlaneseq
    %v2587 = vshrl.u32 %v2586, 7
    %v2588 = vsub.s32 %v2166, %v2587
    %v2589 = vrot.slane %v1655, %v2588
    %v2590 = vsel %vm2171, %v2589, %v2585
    %v2591 = vlaneseq
    %v2592 = vshrl.u32 %v2591, 7
    %v2593 = vsub.s32 %v55, %v2592
    %v2594 = vrot.slane %v1658, %v2593
    %v2595 = vlaneseq
    %v2596 = vshrl.u32 %v2595, 7
    %v2597 = vsub.s32 %v2152, %v2596
    %v2598 = vrot.slane %v1661, %v2597
    %v2599 = vsel %vm2157, %v2598, %v2594
    %v2600 = vlaneseq
    %v2601 = vshrl.u32 %v2600, 7
    %v2602 = vsub.s32 %v2159, %v2601
    %v2603 = vrot.slane %v1664, %v2602
    %v2604 = vsel %vm2164, %v2603, %v2599
    %v2605 = vlaneseq
    %v2606 = vshrl.u32 %v2605, 7
    %v2607 = vsub.s32 %v2166, %v2606
    %v2608 = vrot.slane %v1667, %v2607
    %v2609 = vsel %vm2171, %v2608, %v2604
    %v2610 = vlaneseq
    %v2611 = vshrl.u32 %v2610, 7
    %v2612 = vsub.s32 %v55, %v2611
    %v2613 = vrot.slane %v1670, %v2612
    %v2614 = vlaneseq
    %v2615 = vshrl.u32 %v2614, 7
    %v2616 = vsub.s32 %v2152, %v2615
    %v2617 = vrot.slane %v1673, %v2616
    %v2618 = vsel %vm2157, %v2617, %v2613
    %v2619 = vlaneseq
    %v2620 = vshrl.u32 %v2619, 7
    %v2621 = vsub.s32 %v2159, %v2620
    %v2622 = vrot.slane %v1676, %v2621
    %v2623 = vsel %vm2164, %v2622, %v2618
    %v2624 = vlaneseq
    %v2625 = vshrl.u32 %v2624, 7
    %v2626 = vsub.s32 %v2166, %v2625
    %v2627 = vrot.slane %v1679, %v2626
    %v2628 = vsel %vm2171, %v2627, %v2623
    %v2629 = vlaneseq
    %v2630 = vshrl.u32 %v2629, 7
    %v2631 = vsub.s32 %v55, %v2630
    %v2632 = vrot.slane %v1682, %v2631
    %v2633 = vlaneseq
    %v2634 = vshrl.u32 %v2633, 7
    %v2635 = vsub.s32 %v2152, %v2634
    %v2636 = vrot.slane %v1685, %v2635
    %v2637 = vsel %vm2157, %v2636, %v2632
    %v2638 = vlaneseq
    %v2639 = vshrl.u32 %v2638, 7
    %v2640 = vsub.s32 %v2159, %v2639
    %v2641 = vrot.slane %v1688, %v2640
    %v2642 = vsel %vm2164, %v2641, %v2637
    %v2643 = vlaneseq
    %v2644 = vshrl.u32 %v2643, 7
    %v2645 = vsub.s32 %v2166, %v2644
    %v2646 = vrot.slane %v1691, %v2645
    %v2647 = vsel %vm2171, %v2646, %v2642
    %v2648 = vlaneseq
    %v2649 = vshrl.u32 %v2648, 7
    %v2650 = vsub.s32 %v55, %v2649
    %v2651 = vrot.slane %v1694, %v2650
    %v2652 = vlaneseq
    %v2653 = vshrl.u32 %v2652, 7
    %v2654 = vsub.s32 %v2152, %v2653
    %v2655 = vrot.slane %v1697, %v2654
    %v2656 = vsel %vm2157, %v2655, %v2651
    %v2657 = vlaneseq
    %v2658 = vshrl.u32 %v2657, 7
    %v2659 = vsub.s32 %v2159, %v2658
    %v2660 = vrot.slane %v1700, %v2659
    %v2661 = vsel %vm2164, %v2660, %v2656
    %v2662 = vlaneseq
    %v2663 = vshrl.u32 %v2662, 7
    %v2664 = vsub.s32 %v2166, %v2663
    %v2665 = vrot.slane %v1703, %v2664
    %v2666 = vsel %vm2171, %v2665, %v2661
    %v2667 = vlaneseq
    %v2668 = vshrl.u32 %v2667, 7
    %v2669 = vsub.s32 %v55, %v2668
    %v2670 = vrot.slane %v1706, %v2669
    %v2671 = vlaneseq
    %v2672 = vshrl.u32 %v2671, 7
    %v2673 = vsub.s32 %v2152, %v2672
    %v2674 = vrot.slane %v1709, %v2673
    %v2675 = vsel %vm2157, %v2674, %v2670
    %v2676 = vlaneseq
    %v2677 = vshrl.u32 %v2676, 7
    %v2678 = vsub.s32 %v2159, %v2677
    %v2679 = vrot.slane %v1712, %v2678
    %v2680 = vsel %vm2164, %v2679, %v2675
    %v2681 = vlaneseq
    %v2682 = vshrl.u32 %v2681, 7
    %v2683 = vsub.s32 %v2166, %v2682
    %v2684 = vrot.slane %v1715, %v2683
    %v2685 = vsel %vm2171, %v2684, %v2680
    %v2686 = vlaneseq
    %v2687 = vshrl.u32 %v2686, 7
    %v2688 = vsub.s32 %v55, %v2687
    %v2689 = vrot.slane %v1718, %v2688
    %v2690 = vlaneseq
    %v2691 = vshrl.u32 %v2690, 7
    %v2692 = vsub.s32 %v2152, %v2691
    %v2693 = vrot.slane %v1721, %v2692
    %v2694 = vsel %vm2157, %v2693, %v2689
    %v2695 = vlaneseq
    %v2696 = vshrl.u32 %v2695, 7
    %v2697 = vsub.s32 %v2159, %v2696
    %v2698 = vrot.slane %v1724, %v2697
    %v2699 = vsel %vm2164, %v2698, %v2694
    %v2700 = vlaneseq
    %v2701 = vshrl.u32 %v2700, 7
    %v2702 = vsub.s32 %v2166, %v2701
    %v2703 = vrot.slane %v1727, %v2702
    %v2704 = vsel %vm2171, %v2703, %v2699
    %v2705 = vlaneseq
    %v2706 = vshrl.u32 %v2705, 7
    %v2707 = vsub.s32 %v55, %v2706
    %v2708 = vrot.slane %v1730, %v2707
    %v2709 = vlaneseq
    %v2710 = vshrl.u32 %v2709, 7
    %v2711 = vsub.s32 %v2152, %v2710
    %v2712 = vrot.slane %v1733, %v2711
    %v2713 = vsel %vm2157, %v2712, %v2708
    %v2714 = vlaneseq
    %v2715 = vshrl.u32 %v2714, 7
    %v2716 = vsub.s32 %v2159, %v2715
    %v2717 = vrot.slane %v1736, %v2716
    %v2718 = vsel %vm2164, %v2717, %v2713
    %v2719 = vlaneseq
    %v2720 = vshrl.u32 %v2719, 7
    %v2721 = vsub.s32 %v2166, %v2720
    %v2722 = vrot.slane %v1739, %v2721
    %v2723 = vsel %vm2171, %v2722, %v2718
    %v2724 = vlaneseq
    %v2725 = vshrl.u32 %v2724, 7
    %v2726 = vsub.s32 %v55, %v2725
    %v2727 = vrot.slane %v1742, %v2726
    %v2728 = vlaneseq
    %v2729 = vshrl.u32 %v2728, 7
    %v2730 = vsub.s32 %v2152, %v2729
    %v2731 = vrot.slane %v1745, %v2730
    %v2732 = vsel %vm2157, %v2731, %v2727
    %v2733 = vlaneseq
    %v2734 = vshrl.u32 %v2733, 7
    %v2735 = vsub.s32 %v2159, %v2734
    %v2736 = vrot.slane %v1748, %v2735
    %v2737 = vsel %vm2164, %v2736, %v2732
    %v2738 = vlaneseq
    %v2739 = vshrl.u32 %v2738, 7
    %v2740 = vsub.s32 %v2166, %v2739
    %v2741 = vrot.slane %v1751, %v2740
    %v2742 = vsel %vm2171, %v2741, %v2737
    %v2743 = vlaneseq
    %v2744 = vshrl.u32 %v2743, 7
    %v2745 = vsub.s32 %v55, %v2744
    %v2746 = vrot.slane %v1754, %v2745
    %v2747 = vlaneseq
    %v2748 = vshrl.u32 %v2747, 7
    %v2749 = vsub.s32 %v2152, %v2748
    %v2750 = vrot.slane %v1757, %v2749
    %v2751 = vsel %vm2157, %v2750, %v2746
    %v2752 = vlaneseq
    %v2753 = vshrl.u32 %v2752, 7
    %v2754 = vsub.s32 %v2159, %v2753
    %v2755 = vrot.slane %v1760, %v2754
    %v2756 = vsel %vm2164, %v2755, %v2751
    %v2757 = vlaneseq
    %v2758 = vshrl.u32 %v2757, 7
    %v2759 = vsub.s32 %v2166, %v2758
    %v2760 = vrot.slane %v1763, %v2759
    %v2761 = vsel %vm2171, %v2760, %v2756
    %v2762 = vlaneseq
    %v2763 = vshrl.u32 %v2762, 7
    %v2764 = vsub.s32 %v55, %v2763
    %v2765 = vrot.slane %v1766, %v2764
    %v2766 = vlaneseq
    %v2767 = vshrl.u32 %v2766, 7
    %v2768 = vsub.s32 %v2152, %v2767
    %v2769 = vrot.slane %v1769, %v2768
    %v2770 = vsel %vm2157, %v2769, %v2765
    %v2771 = vlaneseq
    %v2772 = vshrl.u32 %v2771, 7
    %v2773 = vsub.s32 %v2159, %v2772
    %v2774 = vrot.slane %v1772, %v2773
    %v2775 = vsel %vm2164, %v2774, %v2770
    %v2776 = vlaneseq
    %v2777 = vshrl.u32 %v2776, 7
    %v2778 = vsub.s32 %v2166, %v2777
    %v2779 = vrot.slane %v1775, %v2778
    %v2780 = vsel %vm2171, %v2779, %v2775
    %v2781 = vlaneseq
    %v2782 = vshrl.u32 %v2781, 7
    %v2783 = vsub.s32 %v55, %v2782
    %v2784 = vrot.slane %v1778, %v2783
    %v2785 = vlaneseq
    %v2786 = vshrl.u32 %v2785, 7
    %v2787 = vsub.s32 %v2152, %v2786
    %v2788 = vrot.slane %v1781, %v2787
    %v2789 = vsel %vm2157, %v2788, %v2784
    %v2790 = vlaneseq
    %v2791 = vshrl.u32 %v2790, 7
    %v2792 = vsub.s32 %v2159, %v2791
    %v2793 = vrot.slane %v1784, %v2792
    %v2794 = vsel %vm2164, %v2793, %v2789
    %v2795 = vlaneseq
    %v2796 = vshrl.u32 %v2795, 7
    %v2797 = vsub.s32 %v2166, %v2796
    %v2798 = vrot.slane %v1787, %v2797
    %v2799 = vsel %vm2171, %v2798, %v2794
    %v2800 = vlaneseq
    %v2801 = vshrl.u32 %v2800, 7
    %v2802 = vsub.s32 %v55, %v2801
    %v2803 = vrot.slane %v1790, %v2802
    %v2804 = vlaneseq
    %v2805 = vshrl.u32 %v2804, 7
    %v2806 = vsub.s32 %v2152, %v2805
    %v2807 = vrot.slane %v1793, %v2806
    %v2808 = vsel %vm2157, %v2807, %v2803
    %v2809 = vlaneseq
    %v2810 = vshrl.u32 %v2809, 7
    %v2811 = vsub.s32 %v2159, %v2810
    %v2812 = vrot.slane %v1796, %v2811
    %v2813 = vsel %vm2164, %v2812, %v2808
    %v2814 = vlaneseq
    %v2815 = vshrl.u32 %v2814, 7
    %v2816 = vsub.s32 %v2166, %v2815
    %v2817 = vrot.slane %v1799, %v2816
    %v2818 = vsel %vm2171, %v2817, %v2813
    %v2819 = vlaneseq
    %v2820 = vshrl.u32 %v2819, 7
    %v2821 = vsub.s32 %v55, %v2820
    %v2822 = vrot.slane %v1802, %v2821
    %v2823 = vlaneseq
    %v2824 = vshrl.u32 %v2823, 7
    %v2825 = vsub.s32 %v2152, %v2824
    %v2826 = vrot.slane %v1805, %v2825
    %v2827 = vsel %vm2157, %v2826, %v2822
    %v2828 = vlaneseq
    %v2829 = vshrl.u32 %v2828, 7
    %v2830 = vsub.s32 %v2159, %v2829
    %v2831 = vrot.slane %v1808, %v2830
    %v2832 = vsel %vm2164, %v2831, %v2827
    %v2833 = vlaneseq
    %v2834 = vshrl.u32 %v2833, 7
    %v2835 = vsub.s32 %v2166, %v2834
    %v2836 = vrot.slane %v1811, %v2835
    %v2837 = vsel %vm2171, %v2836, %v2832
    %v2838 = vlaneseq
    %v2839 = vshrl.u32 %v2838, 7
    %v2840 = vsub.s32 %v55, %v2839
    %v2841 = vrot.slane %v1814, %v2840
    %v2842 = vlaneseq
    %v2843 = vshrl.u32 %v2842, 7
    %v2844 = vsub.s32 %v2152, %v2843
    %v2845 = vrot.slane %v1817, %v2844
    %v2846 = vsel %vm2157, %v2845, %v2841
    %v2847 = vlaneseq
    %v2848 = vshrl.u32 %v2847, 7
    %v2849 = vsub.s32 %v2159, %v2848
    %v2850 = vrot.slane %v1820, %v2849
    %v2851 = vsel %vm2164, %v2850, %v2846
    %v2852 = vlaneseq
    %v2853 = vshrl.u32 %v2852, 7
    %v2854 = vsub.s32 %v2166, %v2853
    %v2855 = vrot.slane %v1823, %v2854
    %v2856 = vsel %vm2171, %v2855, %v2851
    %v2857 = vlaneseq
    %v2858 = vshrl.u32 %v2857, 7
    %v2859 = vsub.s32 %v55, %v2858
    %v2860 = vrot.slane %v1826, %v2859
    %v2861 = vlaneseq
    %v2862 = vshrl.u32 %v2861, 7
    %v2863 = vsub.s32 %v2152, %v2862
    %v2864 = vrot.slane %v1829, %v2863
    %v2865 = vsel %vm2157, %v2864, %v2860
    %v2866 = vlaneseq
    %v2867 = vshrl.u32 %v2866, 7
    %v2868 = vsub.s32 %v2159, %v2867
    %v2869 = vrot.slane %v1832, %v2868
    %v2870 = vsel %vm2164, %v2869, %v2865
    %v2871 = vlaneseq
    %v2872 = vshrl.u32 %v2871, 7
    %v2873 = vsub.s32 %v2166, %v2872
    %v2874 = vrot.slane %v1835, %v2873
    %v2875 = vsel %vm2171, %v2874, %v2870
    %v2876 = vlaneseq
    %v2877 = vshrl.u32 %v2876, 7
    %v2878 = vsub.s32 %v55, %v2877
    %v2879 = vrot.slane %v1838, %v2878
    %v2880 = vlaneseq
    %v2881 = vshrl.u32 %v2880, 7
    %v2882 = vsub.s32 %v2152, %v2881
    %v2883 = vrot.slane %v1841, %v2882
    %v2884 = vsel %vm2157, %v2883, %v2879
    %v2885 = vlaneseq
    %v2886 = vshrl.u32 %v2885, 7
    %v2887 = vsub.s32 %v2159, %v2886
    %v2888 = vrot.slane %v1844, %v2887
    %v2889 = vsel %vm2164, %v2888, %v2884
    %v2890 = vlaneseq
    %v2891 = vshrl.u32 %v2890, 7
    %v2892 = vsub.s32 %v2166, %v2891
    %v2893 = vrot.slane %v1847, %v2892
    %v2894 = vsel %vm2171, %v2893, %v2889
    %v2895 = vlaneseq
    %v2896 = vshrl.u32 %v2895, 7
    %v2897 = vsub.s32 %v55, %v2896
    %v2898 = vrot.slane %v1850, %v2897
    %v2899 = vlaneseq
    %v2900 = vshrl.u32 %v2899, 7
    %v2901 = vsub.s32 %v2152, %v2900
    %v2902 = vrot.slane %v1853, %v2901
    %v2903 = vsel %vm2157, %v2902, %v2898
    %v2904 = vlaneseq
    %v2905 = vshrl.u32 %v2904, 7
    %v2906 = vsub.s32 %v2159, %v2905
    %v2907 = vrot.slane %v1856, %v2906
    %v2908 = vsel %vm2164, %v2907, %v2903
    %v2909 = vlaneseq
    %v2910 = vshrl.u32 %v2909, 7
    %v2911 = vsub.s32 %v2166, %v2910
    %v2912 = vrot.slane %v1859, %v2911
    %v2913 = vsel %vm2171, %v2912, %v2908
    %v2914 = vlaneseq
    %v2915 = vshrl.u32 %v2914, 7
    %v2916 = vsub.s32 %v55, %v2915
    %v2917 = vrot.slane %v1862, %v2916
    %v2918 = vlaneseq
    %v2919 = vshrl.u32 %v2918, 7
    %v2920 = vsub.s32 %v2152, %v2919
    %v2921 = vrot.slane %v1865, %v2920
    %v2922 = vsel %vm2157, %v2921, %v2917
    %v2923 = vlaneseq
    %v2924 = vshrl.u32 %v2923, 7
    %v2925 = vsub.s32 %v2159, %v2924
    %v2926 = vrot.slane %v1868, %v2925
    %v2927 = vsel %vm2164, %v2926, %v2922
    %v2928 = vlaneseq
    %v2929 = vshrl.u32 %v2928, 7
    %v2930 = vsub.s32 %v2166, %v2929
    %v2931 = vrot.slane %v1871, %v2930
    %v2932 = vsel %vm2171, %v2931, %v2927
    %v2933 = vlaneseq
    %v2934 = vshrl.u32 %v2933, 7
    %v2935 = vsub.s32 %v55, %v2934
    %v2936 = vrot.slane %v1874, %v2935
    %v2937 = vlaneseq
    %v2938 = vshrl.u32 %v2937, 7
    %v2939 = vsub.s32 %v2152, %v2938
    %v2940 = vrot.slane %v1877, %v2939
    %v2941 = vsel %vm2157, %v2940, %v2936
    %v2942 = vlaneseq
    %v2943 = vshrl.u32 %v2942, 7
    %v2944 = vsub.s32 %v2159, %v2943
    %v2945 = vrot.slane %v1880, %v2944
    %v2946 = vsel %vm2164, %v2945, %v2941
    %v2947 = vlaneseq
    %v2948 = vshrl.u32 %v2947, 7
    %v2949 = vsub.s32 %v2166, %v2948
    %v2950 = vrot.slane %v1883, %v2949
    %v2951 = vsel %vm2171, %v2950, %v2946
    %v2952 = vlaneseq
    %v2953 = vshrl.u32 %v2952, 7
    %v2954 = vsub.s32 %v55, %v2953
    %v2955 = vrot.slane %v1886, %v2954
    %v2956 = vlaneseq
    %v2957 = vshrl.u32 %v2956, 7
    %v2958 = vsub.s32 %v2152, %v2957
    %v2959 = vrot.slane %v1889, %v2958
    %v2960 = vsel %vm2157, %v2959, %v2955
    %v2961 = vlaneseq
    %v2962 = vshrl.u32 %v2961, 7
    %v2963 = vsub.s32 %v2159, %v2962
    %v2964 = vrot.slane %v1892, %v2963
    %v2965 = vsel %vm2164, %v2964, %v2960
    %v2966 = vlaneseq
    %v2967 = vshrl.u32 %v2966, 7
    %v2968 = vsub.s32 %v2166, %v2967
    %v2969 = vrot.slane %v1895, %v2968
    %v2970 = vsel %vm2171, %v2969, %v2965
    %v2971 = vlaneseq
    %v2972 = vshrl.u32 %v2971, 7
    %v2973 = vsub.s32 %v55, %v2972
    %v2974 = vrot.slane %v1898, %v2973
    %v2975 = vlaneseq
    %v2976 = vshrl.u32 %v2975, 7
    %v2977 = vsub.s32 %v2152, %v2976
    %v2978 = vrot.slane %v1901, %v2977
    %v2979 = vsel %vm2157, %v2978, %v2974
    %v2980 = vlaneseq
    %v2981 = vshrl.u32 %v2980, 7
    %v2982 = vsub.s32 %v2159, %v2981
    %v2983 = vrot.slane %v1904, %v2982
    %v2984 = vsel %vm2164, %v2983, %v2979
    %v2985 = vlaneseq
    %v2986 = vshrl.u32 %v2985, 7
    %v2987 = vsub.s32 %v2166, %v2986
    %v2988 = vrot.slane %v1907, %v2987
    %v2989 = vsel %vm2171, %v2988, %v2984
    %v2990 = vlaneseq
    %v2991 = vshrl.u32 %v2990, 7
    %v2992 = vsub.s32 %v55, %v2991
    %v2993 = vrot.slane %v1910, %v2992
    %v2994 = vlaneseq
    %v2995 = vshrl.u32 %v2994, 7
    %v2996 = vsub.s32 %v2152, %v2995
    %v2997 = vrot.slane %v1913, %v2996
    %v2998 = vsel %vm2157, %v2997, %v2993
    %v2999 = vlaneseq
    %v3000 = vshrl.u32 %v2999, 7
    %v3001 = vsub.s32 %v2159, %v3000
    %v3002 = vrot.slane %v1916, %v3001
    %v3003 = vsel %vm2164, %v3002, %v2998
    %v3004 = vlaneseq
    %v3005 = vshrl.u32 %v3004, 7
    %v3006 = vsub.s32 %v2166, %v3005
    %v3007 = vrot.slane %v1919, %v3006
    %v3008 = vsel %vm2171, %v3007, %v3003
    %v3009 = vlaneseq
    %v3010 = vshrl.u32 %v3009, 7
    %v3011 = vsub.s32 %v55, %v3010
    %v3012 = vrot.slane %v1922, %v3011
    %v3013 = vlaneseq
    %v3014 = vshrl.u32 %v3013, 7
    %v3015 = vsub.s32 %v2152, %v3014
    %v3016 = vrot.slane %v1925, %v3015
    %v3017 = vsel %vm2157, %v3016, %v3012
    %v3018 = vlaneseq
    %v3019 = vshrl.u32 %v3018, 7
    %v3020 = vsub.s32 %v2159, %v3019
    %v3021 = vrot.slane %v1928, %v3020
    %v3022 = vsel %vm2164, %v3021, %v3017
    %v3023 = vlaneseq
    %v3024 = vshrl.u32 %v3023, 7
    %v3025 = vsub.s32 %v2166, %v3024
    %v3026 = vrot.slane %v1931, %v3025
    %v3027 = vsel %vm2171, %v3026, %v3022
    %v3028 = vlaneseq
    %v3029 = vshrl.u32 %v3028, 7
    %v3030 = vsub.s32 %v55, %v3029
    %v3031 = vrot.slane %v1934, %v3030
    %v3032 = vlaneseq
    %v3033 = vshrl.u32 %v3032, 7
    %v3034 = vsub.s32 %v2152, %v3033
    %v3035 = vrot.slane %v1937, %v3034
    %v3036 = vsel %vm2157, %v3035, %v3031
    %v3037 = vlaneseq
    %v3038 = vshrl.u32 %v3037, 7
    %v3039 = vsub.s32 %v2159, %v3038
    %v3040 = vrot.slane %v1940, %v3039
    %v3041 = vsel %vm2164, %v3040, %v3036
    %v3042 = vlaneseq
    %v3043 = vshrl.u32 %v3042, 7
    %v3044 = vsub.s32 %v2166, %v3043
    %v3045 = vrot.slane %v1943, %v3044
    %v3046 = vsel %vm2171, %v3045, %v3041
    %v3047 = vlaneseq
    %v3048 = vshrl.u32 %v3047, 7
    %v3049 = vsub.s32 %v55, %v3048
    %v3050 = vrot.slane %v1946, %v3049
    %v3051 = vlaneseq
    %v3052 = vshrl.u32 %v3051, 7
    %v3053 = vsub.s32 %v2152, %v3052
    %v3054 = vrot.slane %v1949, %v3053
    %v3055 = vsel %vm2157, %v3054, %v3050
    %v3056 = vlaneseq
    %v3057 = vshrl.u32 %v3056, 7
    %v3058 = vsub.s32 %v2159, %v3057
    %v3059 = vrot.slane %v1952, %v3058
    %v3060 = vsel %vm2164, %v3059, %v3055
    %v3061 = vlaneseq
    %v3062 = vshrl.u32 %v3061, 7
    %v3063 = vsub.s32 %v2166, %v3062
    %v3064 = vrot.slane %v1955, %v3063
    %v3065 = vsel %vm2171, %v3064, %v3060
    %v3066 = vlaneseq
    %v3067 = vshrl.u32 %v3066, 7
    %v3068 = vsub.s32 %v55, %v3067
    %v3069 = vrot.slane %v1958, %v3068
    %v3070 = vlaneseq
    %v3071 = vshrl.u32 %v3070, 7
    %v3072 = vsub.s32 %v2152, %v3071
    %v3073 = vrot.slane %v1961, %v3072
    %v3074 = vsel %vm2157, %v3073, %v3069
    %v3075 = vlaneseq
    %v3076 = vshrl.u32 %v3075, 7
    %v3077 = vsub.s32 %v2159, %v3076
    %v3078 = vrot.slane %v1964, %v3077
    %v3079 = vsel %vm2164, %v3078, %v3074
    %v3080 = vlaneseq
    %v3081 = vshrl.u32 %v3080, 7
    %v3082 = vsub.s32 %v2166, %v3081
    %v3083 = vrot.slane %v1967, %v3082
    %v3084 = vsel %vm2171, %v3083, %v3079
    %v3085 = vlaneseq
    %v3086 = vshrl.u32 %v3085, 7
    %v3087 = vsub.s32 %v55, %v3086
    %v3088 = vrot.slane %v1970, %v3087
    %v3089 = vlaneseq
    %v3090 = vshrl.u32 %v3089, 7
    %v3091 = vsub.s32 %v2152, %v3090
    %v3092 = vrot.slane %v1973, %v3091
    %v3093 = vsel %vm2157, %v3092, %v3088
    %v3094 = vlaneseq
    %v3095 = vshrl.u32 %v3094, 7
    %v3096 = vsub.s32 %v2159, %v3095
    %v3097 = vrot.slane %v1976, %v3096
    %v3098 = vsel %vm2164, %v3097, %v3093
    %v3099 = vlaneseq
    %v3100 = vshrl.u32 %v3099, 7
    %v3101 = vsub.s32 %v2166, %v3100
    %v3102 = vrot.slane %v1979, %v3101
    %v3103 = vsel %vm2171, %v3102, %v3098
    %v3104 = vlaneseq
    %v3105 = vshrl.u32 %v3104, 7
    %v3106 = vsub.s32 %v55, %v3105
    %v3107 = vrot.slane %v1982, %v3106
    %v3108 = vlaneseq
    %v3109 = vshrl.u32 %v3108, 7
    %v3110 = vsub.s32 %v2152, %v3109
    %v3111 = vrot.slane %v1985, %v3110
    %v3112 = vsel %vm2157, %v3111, %v3107
    %v3113 = vlaneseq
    %v3114 = vshrl.u32 %v3113, 7
    %v3115 = vsub.s32 %v2159, %v3114
    %v3116 = vrot.slane %v1988, %v3115
    %v3117 = vsel %vm2164, %v3116, %v3112
    %v3118 = vlaneseq
    %v3119 = vshrl.u32 %v3118, 7
    %v3120 = vsub.s32 %v2166, %v3119
    %v3121 = vrot.slane %v1991, %v3120
    %v3122 = vsel %vm2171, %v3121, %v3117
    %v3123 = vlaneseq
    %v3124 = vshrl.u32 %v3123, 7
    %v3125 = vsub.s32 %v55, %v3124
    %v3126 = vrot.slane %v1994, %v3125
    %v3127 = vlaneseq
    %v3128 = vshrl.u32 %v3127, 7
    %v3129 = vsub.s32 %v2152, %v3128
    %v3130 = vrot.slane %v1997, %v3129
    %v3131 = vsel %vm2157, %v3130, %v3126
    %v3132 = vlaneseq
    %v3133 = vshrl.u32 %v3132, 7
    %v3134 = vsub.s32 %v2159, %v3133
    %v3135 = vrot.slane %v2000, %v3134
    %v3136 = vsel %vm2164, %v3135, %v3131
    %v3137 = vlaneseq
    %v3138 = vshrl.u32 %v3137, 7
    %v3139 = vsub.s32 %v2166, %v3138
    %v3140 = vrot.slane %v2003, %v3139
    %v3141 = vsel %vm2171, %v3140, %v3136
    %v3142 = vlaneseq
    %v3143 = vshrl.u32 %v3142, 7
    %v3144 = vsub.s32 %v55, %v3143
    %v3145 = vrot.slane %v2006, %v3144
    %v3146 = vlaneseq
    %v3147 = vshrl.u32 %v3146, 7
    %v3148 = vsub.s32 %v2152, %v3147
    %v3149 = vrot.slane %v2009, %v3148
    %v3150 = vsel %vm2157, %v3149, %v3145
    %v3151 = vlaneseq
    %v3152 = vshrl.u32 %v3151, 7
    %v3153 = vsub.s32 %v2159, %v3152
    %v3154 = vrot.slane %v2012, %v3153
    %v3155 = vsel %vm2164, %v3154, %v3150
    %v3156 = vlaneseq
    %v3157 = vshrl.u32 %v3156, 7
    %v3158 = vsub.s32 %v2166, %v3157
    %v3159 = vrot.slane %v2015, %v3158
    %v3160 = vsel %vm2171, %v3159, %v3155
    %v3161 = vlaneseq
    %v3162 = vshrl.u32 %v3161, 7
    %v3163 = vsub.s32 %v55, %v3162
    %v3164 = vrot.slane %v2018, %v3163
    %v3165 = vlaneseq
    %v3166 = vshrl.u32 %v3165, 7
    %v3167 = vsub.s32 %v2152, %v3166
    %v3168 = vrot.slane %v2021, %v3167
    %v3169 = vsel %vm2157, %v3168, %v3164
    %v3170 = vlaneseq
    %v3171 = vshrl.u32 %v3170, 7
    %v3172 = vsub.s32 %v2159, %v3171
    %v3173 = vrot.slane %v2024, %v3172
    %v3174 = vsel %vm2164, %v3173, %v3169
    %v3175 = vlaneseq
    %v3176 = vshrl.u32 %v3175, 7
    %v3177 = vsub.s32 %v2166, %v3176
    %v3178 = vrot.slane %v2027, %v3177
    %v3179 = vsel %vm2171, %v3178, %v3174
    %v3180 = vlaneseq
    %v3181 = vshrl.u32 %v3180, 7
    %v3182 = vsub.s32 %v55, %v3181
    %v3183 = vrot.slane %v2030, %v3182
    %v3184 = vlaneseq
    %v3185 = vshrl.u32 %v3184, 7
    %v3186 = vsub.s32 %v2152, %v3185
    %v3187 = vrot.slane %v2033, %v3186
    %v3188 = vsel %vm2157, %v3187, %v3183
    %v3189 = vlaneseq
    %v3190 = vshrl.u32 %v3189, 7
    %v3191 = vsub.s32 %v2159, %v3190
    %v3192 = vrot.slane %v2036, %v3191
    %v3193 = vsel %vm2164, %v3192, %v3188
    %v3194 = vlaneseq
    %v3195 = vshrl.u32 %v3194, 7
    %v3196 = vsub.s32 %v2166, %v3195
    %v3197 = vrot.slane %v2039, %v3196
    %v3198 = vsel %vm2171, %v3197, %v3193
    %v3199 = vlaneseq
    %v3200 = vshrl.u32 %v3199, 7
    %v3201 = vsub.s32 %v55, %v3200
    %v3202 = vrot.slane %v2042, %v3201
    %v3203 = vlaneseq
    %v3204 = vshrl.u32 %v3203, 7
    %v3205 = vsub.s32 %v2152, %v3204
    %v3206 = vrot.slane %v2045, %v3205
    %v3207 = vsel %vm2157, %v3206, %v3202
    %v3208 = vlaneseq
    %v3209 = vshrl.u32 %v3208, 7
    %v3210 = vsub.s32 %v2159, %v3209
    %v3211 = vrot.slane %v2048, %v3210
    %v3212 = vsel %vm2164, %v3211, %v3207
    %v3213 = vlaneseq
    %v3214 = vshrl.u32 %v3213, 7
    %v3215 = vsub.s32 %v2166, %v3214
    %v3216 = vrot.slane %v2051, %v3215
    %v3217 = vsel %vm2171, %v3216, %v3212
    %v3218 = vlaneseq
    %v3219 = vshrl.u32 %v3218, 7
    %v3220 = vsub.s32 %v55, %v3219
    %v3221 = vrot.slane %v2054, %v3220
    %v3222 = vlaneseq
    %v3223 = vshrl.u32 %v3222, 7
    %v3224 = vsub.s32 %v2152, %v3223
    %v3225 = vrot.slane %v2057, %v3224
    %v3226 = vsel %vm2157, %v3225, %v3221
    %v3227 = vlaneseq
    %v3228 = vshrl.u32 %v3227, 7
    %v3229 = vsub.s32 %v2159, %v3228
    %v3230 = vrot.slane %v2060, %v3229
    %v3231 = vsel %vm2164, %v3230, %v3226
    %v3232 = vlaneseq
    %v3233 = vshrl.u32 %v3232, 7
    %v3234 = vsub.s32 %v2166, %v3233
    %v3235 = vrot.slane %v2063, %v3234
    %v3236 = vsel %vm2171, %v3235, %v3231
    %v3237 = vlaneseq
    %v3238 = vshrl.u32 %v3237, 7
    %v3239 = vsub.s32 %v55, %v3238
    %v3240 = vrot.slane %v2066, %v3239
    %v3241 = vlaneseq
    %v3242 = vshrl.u32 %v3241, 7
    %v3243 = vsub.s32 %v2152, %v3242
    %v3244 = vrot.slane %v2069, %v3243
    %v3245 = vsel %vm2157, %v3244, %v3240
    %v3246 = vlaneseq
    %v3247 = vshrl.u32 %v3246, 7
    %v3248 = vsub.s32 %v2159, %v3247
    %v3249 = vrot.slane %v2072, %v3248
    %v3250 = vsel %vm2164, %v3249, %v3245
    %v3251 = vlaneseq
    %v3252 = vshrl.u32 %v3251, 7
    %v3253 = vsub.s32 %v2166, %v3252
    %v3254 = vrot.slane %v2075, %v3253
    %v3255 = vsel %vm2171, %v3254, %v3250
    %v3256 = vlaneseq
    %v3257 = vshrl.u32 %v3256, 7
    %v3258 = vsub.s32 %v55, %v3257
    %v3259 = vrot.slane %v2078, %v3258
    %v3260 = vlaneseq
    %v3261 = vshrl.u32 %v3260, 7
    %v3262 = vsub.s32 %v2152, %v3261
    %v3263 = vrot.slane %v2081, %v3262
    %v3264 = vsel %vm2157, %v3263, %v3259
    %v3265 = vlaneseq
    %v3266 = vshrl.u32 %v3265, 7
    %v3267 = vsub.s32 %v2159, %v3266
    %v3268 = vrot.slane %v2084, %v3267
    %v3269 = vsel %vm2164, %v3268, %v3264
    %v3270 = vlaneseq
    %v3271 = vshrl.u32 %v3270, 7
    %v3272 = vsub.s32 %v2166, %v3271
    %v3273 = vrot.slane %v2087, %v3272
    %v3274 = vsel %vm2171, %v3273, %v3269
    %v3275 = vlaneseq
    %v3276 = vshrl.u32 %v3275, 7
    %v3277 = vsub.s32 %v55, %v3276
    %v3278 = vrot.slane %v2090, %v3277
    %v3279 = vlaneseq
    %v3280 = vshrl.u32 %v3279, 7
    %v3281 = vsub.s32 %v2152, %v3280
    %v3282 = vrot.slane %v2093, %v3281
    %v3283 = vsel %vm2157, %v3282, %v3278
    %v3284 = vlaneseq
    %v3285 = vshrl.u32 %v3284, 7
    %v3286 = vsub.s32 %v2159, %v3285
    %v3287 = vrot.slane %v2096, %v3286
    %v3288 = vsel %vm2164, %v3287, %v3283
    %v3289 = vlaneseq
    %v3290 = vshrl.u32 %v3289, 7
    %v3291 = vsub.s32 %v2166, %v3290
    %v3292 = vrot.slane %v2099, %v3291
    %v3293 = vsel %vm2171, %v3292, %v3288
    %v3294 = vlaneseq
    %v3295 = vshrl.u32 %v3294, 7
    %v3296 = vsub.s32 %v55, %v3295
    %v3297 = vrot.slane %v2102, %v3296
    %v3298 = vlaneseq
    %v3299 = vshrl.u32 %v3298, 7
    %v3300 = vsub.s32 %v2152, %v3299
    %v3301 = vrot.slane %v2105, %v3300
    %v3302 = vsel %vm2157, %v3301, %v3297
    %v3303 = vlaneseq
    %v3304 = vshrl.u32 %v3303, 7
    %v3305 = vsub.s32 %v2159, %v3304
    %v3306 = vrot.slane %v2108, %v3305
    %v3307 = vsel %vm2164, %v3306, %v3302
    %v3308 = vlaneseq
    %v3309 = vshrl.u32 %v3308, 7
    %v3310 = vsub.s32 %v2166, %v3309
    %v3311 = vrot.slane %v2111, %v3310
    %v3312 = vsel %vm2171, %v3311, %v3307
    %v3313 = vlaneseq
    %v3314 = vshrl.u32 %v3313, 7
    %v3315 = vsub.s32 %v55, %v3314
    %v3316 = vrot.slane %v2114, %v3315
    %v3317 = vlaneseq
    %v3318 = vshrl.u32 %v3317, 7
    %v3319 = vsub.s32 %v2152, %v3318
    %v3320 = vrot.slane %v2117, %v3319
    %v3321 = vsel %vm2157, %v3320, %v3316
    %v3322 = vlaneseq
    %v3323 = vshrl.u32 %v3322, 7
    %v3324 = vsub.s32 %v2159, %v3323
    %v3325 = vrot.slane %v2120, %v3324
    %v3326 = vsel %vm2164, %v3325, %v3321
    %v3327 = vlaneseq
    %v3328 = vshrl.u32 %v3327, 7
    %v3329 = vsub.s32 %v2166, %v3328
    %v3330 = vrot.slane %v2123, %v3329
    %v3331 = vsel %vm2171, %v3330, %v3326
    %v3332 = vlaneseq
    %v3333 = vshrl.u32 %v3332, 7
    %v3334 = vsub.s32 %v55, %v3333
    %v3335 = vrot.slane %v2126, %v3334
    %v3336 = vlaneseq
    %v3337 = vshrl.u32 %v3336, 7
    %v3338 = vsub.s32 %v2152, %v3337
    %v3339 = vrot.slane %v2129, %v3338
    %v3340 = vsel %vm2157, %v3339, %v3335
    %v3341 = vlaneseq
    %v3342 = vshrl.u32 %v3341, 7
    %v3343 = vsub.s32 %v2159, %v3342
    %v3344 = vrot.slane %v2132, %v3343
    %v3345 = vsel %vm2164, %v3344, %v3340
    %v3346 = vlaneseq
    %v3347 = vshrl.u32 %v3346, 7
    %v3348 = vsub.s32 %v2166, %v3347
    %v3349 = vrot.slane %v2135, %v3348
    %v3350 = vsel %vm2171, %v3349, %v3345
    %v3351 = vlaneseq
    %v3352 = vshrl.u32 %v3351, 7
    %v3353 = vsub.s32 %v55, %v3352
    %v3354 = vrot.slane %v2138, %v3353
    %v3355 = vlaneseq
    %v3356 = vshrl.u32 %v3355, 7
    %v3357 = vsub.s32 %v2152, %v3356
    %v3358 = vrot.slane %v2141, %v3357
    %v3359 = vsel %vm2157, %v3358, %v3354
    %v3360 = vlaneseq
    %v3361 = vshrl.u32 %v3360, 7
    %v3362 = vsub.s32 %v2159, %v3361
    %v3363 = vrot.slane %v2144, %v3362
    %v3364 = vsel %vm2164, %v3363, %v3359
    %v3365 = vlaneseq
    %v3366 = vshrl.u32 %v3365, 7
    %v3367 = vsub.s32 %v2166, %v3366
    %v3368 = vrot.slane %v2147, %v3367
    %v3369 = vsel %vm2171, %v3368, %v3364
    %vm3370 = vcmask 1041409
    %v3371 = vsel %vm3370, %v2191, %v2172
    %vm3372 = vcmask 1042434
    %v3373 = vsel %vm3372, %v2210, %v3371
    %vm3374 = vcmask 1043459
    %v3375 = vsel %vm3374, %v2229, %v3373
    %vm3376 = vcmask 1044484
    %v3377 = vsel %vm3376, %v2248, %v3375
    %vm3378 = vcmask 1045509
    %v3379 = vsel %vm3378, %v2267, %v3377
    %vm3380 = vcmask 1046534
    %v3381 = vsel %vm3380, %v2286, %v3379
    %vm3382 = vcmask 1047559
    %v3383 = vsel %vm3382, %v2305, %v3381
    %v3384 = vsel %vm3370, %v2343, %v2324
    %v3385 = vsel %vm3372, %v2362, %v3384
    %v3386 = vsel %vm3374, %v2381, %v3385
    %v3387 = vsel %vm3376, %v2400, %v3386
    %v3388 = vsel %vm3378, %v2419, %v3387
    %v3389 = vsel %vm3380, %v2438, %v3388
    %v3390 = vsel %vm3382, %v2457, %v3389
    %v3391 = vsel %vm3370, %v2495, %v2476
    %v3392 = vsel %vm3372, %v2514, %v3391
    %v3393 = vsel %vm3374, %v2533, %v3392
    %v3394 = vsel %vm3376, %v2552, %v3393
    %v3395 = vsel %vm3378, %v2571, %v3394
    %v3396 = vsel %vm3380, %v2590, %v3395
    %v3397 = vsel %vm3382, %v2609, %v3396
    %v3398 = vsel %vm3370, %v2647, %v2628
    %v3399 = vsel %vm3372, %v2666, %v3398
    %v3400 = vsel %vm3374, %v2685, %v3399
    %v3401 = vsel %vm3376, %v2704, %v3400
    %v3402 = vsel %vm3378, %v2723, %v3401
    %v3403 = vsel %vm3380, %v2742, %v3402
    %v3404 = vsel %vm3382, %v2761, %v3403
    %v3405 = vsel %vm3370, %v2799, %v2780
    %v3406 = vsel %vm3372, %v2818, %v3405
    %v3407 = vsel %vm3374, %v2837, %v3406
    %v3408 = vsel %vm3376, %v2856, %v3407
    %v3409 = vsel %vm3378, %v2875, %v3408
    %v3410 = vsel %vm3380, %v2894, %v3409
    %v3411 = vsel %vm3382, %v2913, %v3410
    %v3412 = vsel %vm3370, %v2951, %v2932
    %v3413 = vsel %vm3372, %v2970, %v3412
    %v3414 = vsel %vm3374, %v2989, %v3413
    %v3415 = vsel %vm3376, %v3008, %v3414
    %v3416 = vsel %vm3378, %v3027, %v3415
    %v3417 = vsel %vm3380, %v3046, %v3416
    %v3418 = vsel %vm3382, %v3065, %v3417
    %v3419 = vsel %vm3370, %v3103, %v3084
    %v3420 = vsel %vm3372, %v3122, %v3419
    %v3421 = vsel %vm3374, %v3141, %v3420
    %v3422 = vsel %vm3376, %v3160, %v3421
    %v3423 = vsel %vm3378, %v3179, %v3422
    %v3424 = vsel %vm3380, %v3198, %v3423
    %v3425 = vsel %vm3382, %v3217, %v3424
    %v3426 = vsel %vm3370, %v3255, %v3236
    %v3427 = vsel %vm3372, %v3274, %v3426
    %v3428 = vsel %vm3374, %v3293, %v3427
    %v3429 = vsel %vm3376, %v3312, %v3428
    %v3430 = vsel %vm3378, %v3331, %v3429
    %v3431 = vsel %vm3380, %v3350, %v3430
    %v3432 = vsel %vm3382, %v3369, %v3431
    %v3441 = vsel %vm103, %v3383, 0.0
    %3442 = vadd.xlane.f32.xlu0 %v3441
    %v3443 = vpop.xlane.xlu0 %3442
    %v3444 = vsel %vm103, %v3390, 0.0
    %3445 = vadd.xlane.f32.xlu0 %v3444
    %v3446 = vpop.xlane.xlu0 %3445
    %v3447 = vsel %vm103, %v3397, 0.0
    %3448 = vadd.xlane.f32.xlu0 %v3447
    %v3449 = vpop.xlane.xlu0 %3448
    %v3450 = vsel %vm103, %v3404, 0.0
    %3451 = vadd.xlane.f32.xlu0 %v3450
    %v3452 = vpop.xlane.xlu0 %3451
    %v3453 = vsel %vm103, %v3411, 0.0
    %3454 = vadd.xlane.f32.xlu0 %v3453
    %v3455 = vpop.xlane.xlu0 %3454
    %v3456 = vsel %vm103, %v3418, 0.0
    %3457 = vadd.xlane.f32.xlu0 %v3456
    %v3458 = vpop.xlane.xlu0 %3457
    %v3459 = vsel %vm103, %v3425, 0.0
    %3460 = vadd.xlane.f32.xlu0 %v3459
    %v3461 = vpop.xlane.xlu0 %3460
    %v3462 = vsel %vm103, %v3432, 0.0
    %3463 = vadd.xlane.f32.xlu0 %v3462
    %v3464 = vpop.xlane.xlu0 %3463
    %v3465 = vld [vmem:[%s1] sm:$0x3]
    %v3466 = vlaneseq
    %v3467 = vshrl.u32 %v3466, 7
    %v3468 = vsub.s32 0, %v3467
    %v3469 = vrot.slane %v3465, %v3468
    %3471 = vbcast.lane.b32.xlu0 %v3469, 256
    %v3472 = vpop.permute.xlu0 %3471
    %v3473 = vlaneseq
    %v3474 = vshrl.u32 %v3473, 7
    %v3475 = vsub.s32 1, %v3474
    %v3476 = vrot.slane %v3465, %v3475
    %3478 = vbcast.lane.b32.xlu0 %v3476, 256
    %v3479 = vpop.permute.xlu0 %3478
    %vm3480 = vcmp.eq.s32.totalorder %v55, %v3472
    %vm3481 = vcmp.eq.s32.totalorder %v55, %v3479
    %v3482 = vsel %vm3480, 1.0, 0.0
    %v3483 = vsel %vm3481, 1.0, 0.0
    %v3492 = vlaneseq
    %v3493 = vshrl.u32 %v3492, 7
    %v3494 = vsub.s32 %v55, %v3493
    %v3495 = vrot.slane %v3443, %v3494
    %v3496 = vlaneseq
    %v3497 = vshrl.u32 %v3496, 7
    %v3498 = vsub.s32 %v2152, %v3497
    %v3499 = vrot.slane %v3446, %v3498
    %v3500 = vsel %vm2157, %v3499, %v3495
    %v3501 = vlaneseq
    %v3502 = vshrl.u32 %v3501, 7
    %v3503 = vsub.s32 %v2159, %v3502
    %v3504 = vrot.slane %v3449, %v3503
    %v3505 = vsel %vm2164, %v3504, %v3500
    %v3506 = vlaneseq
    %v3507 = vshrl.u32 %v3506, 7
    %v3508 = vsub.s32 %v2166, %v3507
    %v3509 = vrot.slane %v3452, %v3508
    %v3510 = vsel %vm2171, %v3509, %v3505
    %v3511 = vlaneseq
    %v3512 = vshrl.u32 %v3511, 7
    %v3513 = vsub.s32 %v55, %v3512
    %v3514 = vrot.slane %v3455, %v3513
    %v3515 = vlaneseq
    %v3516 = vshrl.u32 %v3515, 7
    %v3517 = vsub.s32 %v2152, %v3516
    %v3518 = vrot.slane %v3458, %v3517
    %v3519 = vsel %vm2157, %v3518, %v3514
    %v3520 = vlaneseq
    %v3521 = vshrl.u32 %v3520, 7
    %v3522 = vsub.s32 %v2159, %v3521
    %v3523 = vrot.slane %v3461, %v3522
    %v3524 = vsel %vm2164, %v3523, %v3519
    %v3525 = vlaneseq
    %v3526 = vshrl.u32 %v3525, 7
    %v3527 = vsub.s32 %v2166, %v3526
    %v3528 = vrot.slane %v3464, %v3527
    %v3529 = vsel %vm2171, %v3528, %v3524
    %v3530 = vsel %vm3372, %v3510, %v3510
    %v3531 = vsel %vm3374, %v3510, %v3530
    %v3532 = vsel %vm3376, %v3510, %v3531
    %v3533 = vsel %vm3378, %v3510, %v3532
    %v3534 = vsel %vm3380, %v3510, %v3533
    %v3535 = vsel %vm3382, %v3510, %v3534
    %v3536 = vsel %vm3372, %v3529, %v3529
    %v3537 = vsel %vm3374, %v3529, %v3536
    %v3538 = vsel %vm3376, %v3529, %v3537
    %v3539 = vsel %vm3378, %v3529, %v3538
    %v3540 = vsel %vm3380, %v3529, %v3539
    %v3541 = vsel %vm3382, %v3529, %v3540
    %v3544 = vmul.f32 %v3482, %v3535
    %v3545 = vmul.f32 %v3483, %v3541
    %v3546 = vsel %vm103, %v3544, 0.0
    %3547 = vadd.xlane.f32.xlu0 %v3546
    %v3548 = vpop.xlane.xlu0 %3547
    %v3549 = vsel %vm103, %v3545, 0.0
    %3550 = vadd.xlane.f32.xlu0 %v3549
    %v3551 = vpop.xlane.xlu0 %3550
    %v3554 = vlaneseq
    %v3555 = vshrl.u32 %v3554, 7
    %v3556 = vsub.s32 %v55, %v3555
    %v3557 = vrot.slane %v3548, %v3556
    %v3558 = vlaneseq
    %v3559 = vshrl.u32 %v3558, 7
    %v3560 = vsub.s32 %v55, %v3559
    %v3561 = vrot.slane %v3551, %v3560
    %v3562 = vsel %vm3370, %v3561, %v3557
    %vm3564 = vcmask 58368
    %3565 = vst.msk [vmem:[#allocation7] sm:$0x3] %vm3564, %v3562
    // Predicated region
    $region26: #{tpu_custom_call.1} parent=1 // pred_check
      _
    $region27: #{tpu_custom_call.1} parent=1 // pred_check_branch
      %3567 = sbr.rel (0) target = $region29
    $region28: #{tpu_custom_call.1} parent=1 // pred_region
      %s3569 = ssub.s32 32, 32
      %3570 = vsyncadd [#allocation4], %s3569
      %s3572 = sshll.u32 [#allocation7], 4
      %s3573 = int_to_ptr.vmem [resolvable:$true] %s3572
      %3575 = dma.vmem_to_hbm [thread:$0]  %s3573, 32, %s4, [#allocation4]
    $region29: #{tpu_custom_call.1} parent=1 // pred_fallthru
      _
    // Predicated region
    $region30: #{tpu_custom_call.1} parent=1 // pred_check
      _
    $region31: #{tpu_custom_call.1} parent=1 // pred_check_branch
      %3577 = sbr.rel (0) target = $region33
    $region32: #{tpu_custom_call.1} parent=1 // pred_region
      %3578 = dma.done [#allocation4], 32
    $region33: #{tpu_custom_call.1} parent=1 // pred_fallthru
      _
    %3579 = vsyncpa [#allocation3], 1
    %3580 = vsyncpa [#allocation6], 1
    %3581 = vsyncpa [#allocation4], 1

</llo_original>
